<compile_context>
chip_gen: v7x
topology: tpu7x:2x2x1
jax: 0.10.0
libtpu: 0.0.40
codegen_flags: <defaults>
</compile_context>

<pallas_src>
import math

import jax
import jax.numpy as jnp
from jax import lax
from jax.experimental import pallas as pl
from jax.experimental.pallas import tpu as pltpu


# ---------------------------------------------------------------------------
# Kernel 1: row-tiled dense layer  y = x @ W + b
#   x / W are bf16 (cast once on the host -> halves HBM traffic), f32 accum.
#   W and b stay VMEM-resident across row tiles (index_map returns (0, 0)).
# ---------------------------------------------------------------------------
def _linear_kernel(x_ref, w_ref, b_ref, o_ref):
    acc = jnp.dot(x_ref[...], w_ref[...], preferred_element_type=jnp.float32)
    o_ref[...] = (acc + b_ref[...]).astype(o_ref.dtype)


def _linear(x_bf16, w_bf16, b_f32, *, out_dtype, tm=256):
    rows, in_dim = x_bf16.shape
    out_dim = w_bf16.shape[1]
    tm = rows if rows <= tm else tm
    return pl.pallas_call(
        _linear_kernel,
        out_shape=jax.ShapeDtypeStruct((rows, out_dim), out_dtype),
        grid_spec=pltpu.PrefetchScalarGridSpec(
            num_scalar_prefetch=0,
            grid=(pl.cdiv(rows, tm),),
            in_specs=[
                pl.BlockSpec((tm, in_dim), lambda i: (i, 0)),
                pl.BlockSpec((in_dim, out_dim), lambda i: (0, 0)),
                pl.BlockSpec((1, out_dim), lambda i: (0, 0)),
            ],
            out_specs=pl.BlockSpec((tm, out_dim), lambda i: (i, 0)),
        ),
        compiler_params=pltpu.CompilerParams(
            dimension_semantics=("parallel",)),
    )(x_bf16, w_bf16, b_f32)


# ---------------------------------------------------------------------------
# Kernel 2: per-(head, batch) attention: scores + softmax + AV.
#   kx_ref/qx_ref: (1, len, H) bf16 slices of the (B, len, n_head*H) projection
#   out_ref:       (1, q_len, H) slab written straight into the concat layout
#   score_ref:     (1, 1, q_len, k_len) f32 softmax scores
# ---------------------------------------------------------------------------
def _attn_head_kernel(kx_ref, qx_ref, out_ref, score_ref):
    kx = kx_ref[0]                                       # (k_len, H) bf16
    qx = qx_ref[0]                                       # (q_len, H) bf16

    # score_function == 'dot_product': contract last dims directly (no kx.T).
    s = lax.dot_general(qx, kx, (((1,), (1,)), ((), ())),
                        preferred_element_type=jnp.float32)   # (q_len, k_len)

    # softmax over the key axis; divide moved to the EUP via approx reciprocal.
    m = jnp.max(s, axis=-1, keepdims=True)
    p = jnp.exp(s - m)
    denom = jnp.sum(p, axis=-1, keepdims=True)
    attn = p * pl.reciprocal(denom, approx=True)

    # output = attn @ kx  (the module uses the projected keys as values)
    out = jnp.dot(attn.astype(kx.dtype), kx,
                  preferred_element_type=jnp.float32)         # (q_len, H)

    out_ref[0] = out.astype(out_ref.dtype)
    score_ref[0, 0] = attn.astype(score_ref.dtype)


def attention_forward(k, q, params, *, n_head, hidden_dim, out_dim):
    """Returns (output, score) matching the PyTorch module's forward."""
    if k.ndim == 2:
        k = k[:, None, :]
    if q.ndim == 2:
        q = q[:, None, :]
    B, k_len, E = k.shape
    _, q_len, _ = q.shape
    H = hidden_dim
    NH = n_head * H
    bf16 = jnp.bfloat16

    wk = params["wk"].astype(bf16)
    wq = params["wq"].astype(bf16)
    wp = params["wp"].astype(bf16)
    bk = params["bk"].reshape(1, NH)
    bq = params["bq"].reshape(1, NH)
    bp = params["bp"].reshape(1, out_dim)

    # --- hoisted K/Q projections: one big MXU-shaped matmul each ---
    kx = _linear(k.reshape(B * k_len, E).astype(bf16), wk, bk, out_dtype=bf16)
    qx = _linear(q.reshape(B * q_len, E).astype(bf16), wq, bq, out_dtype=bf16)
    kx = kx.reshape(B, k_len, NH)
    qx = qx.reshape(B, q_len, NH)

    # --- per-(head, batch) attention ---
    out_heads, score = pl.pallas_call(
        _attn_head_kernel,
        out_shape=(
            jax.ShapeDtypeStruct((B, q_len, NH), bf16),
            jax.ShapeDtypeStruct((n_head, B, q_len, k_len), jnp.float32),
        ),
        grid_spec=pltpu.PrefetchScalarGridSpec(
            num_scalar_prefetch=0,
            grid=(n_head, B),
            in_specs=[
                pl.BlockSpec((1, k_len, H), lambda h, b: (b, 0, h)),
                pl.BlockSpec((1, q_len, H), lambda h, b: (b, 0, h)),
            ],
            out_specs=[
                # Direct write into the (B, q_len, n_head*H) concat layout.
                pl.BlockSpec((1, q_len, H), lambda h, b: (b, 0, h)),
                pl.BlockSpec((1, 1, q_len, k_len), lambda h, b: (h, b, 0, 0)),
            ],
        ),
        compiler_params=pltpu.CompilerParams(
            dimension_semantics=("parallel", "parallel")),
    )(kx, qx)

    # --- output projection (row-tiled, weight VMEM-resident) ---
    proj = _linear(out_heads.reshape(B * q_len, NH), wp, bp,
                   out_dtype=jnp.float32)
    output = proj.reshape(B, q_len, out_dim)

    # dropout(p=0) is identity.
    score_out = score.reshape(n_head * B, q_len, k_len)   # head-major, free view
    return output, score_out


def init_params(key, embed_dim, hidden_dim, out_dim, n_head):
    """nn.Linear-style U(-1/sqrt(fan_in), +1/sqrt(fan_in)) init, x @ W layout."""
    ks = jax.random.split(key, 6)

    def u(kk, shape, fan_in):
        bound = 1.0 / math.sqrt(fan_in)
        return jax.random.uniform(kk, shape, jnp.float32, -bound, bound)

    NH = n_head * hidden_dim
    return {
        "wk": u(ks[0], (embed_dim, NH), embed_dim),
        "bk": u(ks[1], (NH,), embed_dim),
        "wq": u(ks[2], (embed_dim, NH), embed_dim),
        "bq": u(ks[3], (NH,), embed_dim),
        "wp": u(ks[4], (NH, out_dim), NH),
        "bp": u(ks[5], (out_dim,), NH),
    }


def _reference(k, q, params, *, n_head, hidden_dim, out_dim):
    """Pure-JAX reference of the PyTorch forward.

    Mirrors the kernel's bf16-MXU-input / f32-accumulation precision so the
    check stays tight; the only remaining deltas are accumulation order and
    the approx reciprocal in the kernel softmax.
    """
    B, k_len, E = k.shape
    _, q_len, _ = q.shape
    H = hidden_dim
    NH = n_head * H
    bf16, f32 = jnp.bfloat16, jnp.float32

    def lin(x, w, b, out_dtype):
        y = jnp.dot(x.astype(bf16), w.astype(bf16),
                    preferred_element_type=f32) + b
        return y.astype(out_dtype)

    kx = lin(k.reshape(B * k_len, E), params["wk"], params["bk"], bf16)
    qx = lin(q.reshape(B * q_len, E), params["wq"], params["bq"], bf16)
    kx = jnp.transpose(kx.reshape(B, k_len, n_head, H), (2, 0, 1, 3))
    qx = jnp.transpose(qx.reshape(B, q_len, n_head, H), (2, 0, 1, 3))

    s = jnp.einsum("hbqd,hbkd->hbqk", qx, kx, preferred_element_type=f32)
    attn = jax.nn.softmax(s, axis=-1)
    out = jnp.einsum("hbqk,hbkd->hbqd", attn.astype(bf16), kx,
                     preferred_element_type=f32).astype(bf16)
    concat = jnp.transpose(out, (1, 2, 0, 3)).reshape(B, q_len, NH)
    proj = jnp.dot(concat, params["wp"].astype(bf16),
                   preferred_element_type=f32) + params["bp"]
    return proj.reshape(B, q_len, out_dim), attn.reshape(n_head * B, q_len, k_len)


if __name__ == "__main__":
    # Small but lane/sublane-aligned shapes (multiples of 128 / 8).
    embed_dim = 256
    n_head = 2
    hidden_dim = embed_dim // n_head     # 128 (module default)
    out_dim = embed_dim                  # 256 (module default)
    B, k_len, q_len = 4, 128, 128

    key = jax.random.PRNGKey(0)
    kp, kk, kq = jax.random.split(key, 3)
    params = init_params(kp, embed_dim, hidden_dim, out_dim, n_head)
    k = jax.random.normal(kk, (B, k_len, embed_dim), jnp.float32)
    q = jax.random.normal(kq, (B, q_len, embed_dim), jnp.float32)

    fwd = jax.jit(attention_forward,
                  static_argnames=("n_head", "hidden_dim", "out_dim"))
    output, score = fwd(k, q, params, n_head=n_head,
                        hidden_dim=hidden_dim, out_dim=out_dim)
    output = jax.block_until_ready(output)
    score = jax.block_until_ready(score)

    ref_out, ref_score = _reference(k, q, params, n_head=n_head,
                                    hidden_dim=hidden_dim, out_dim=out_dim)

    assert output.shape == (B, q_len, out_dim)
    assert score.shape == (n_head * B, q_len, k_len)
    assert jnp.allclose(output, ref_out, atol=1e-2, rtol=1e-2), "output mismatch"
    assert jnp.allclose(score, ref_score, atol=1e-2, rtol=1e-2), "score mismatch"

    print("KERNEL_OK")
</pallas_src>

<mosaic_0001>
module attributes {stable_mosaic.version = 11 : i64} {
  func.func @_linear_kernel(%arg0: i32, %arg1: memref<256x256xbf16, #tpu.memory_space<vmem>>, %arg2: memref<256x256xbf16, #tpu.memory_space<vmem>>, %arg3: memref<1x256xf32, #tpu.memory_space<vmem>>, %arg4: memref<256x256xbf16, #tpu.memory_space<vmem>>) attributes {dimension_semantics = [#tpu.dimension_semantics<parallel>], iteration_bounds = array<i64: 2>, scalar_prefetch = 0 : i64, scratch_operands = 0 : i64, tpu.core_type = #tpu.core_type<tc>, window_params = [{transform_indices = @transform_0, window_bounds = array<i64: 256, 256>}, {pipeline_mode = #tpu.pipeline_mode<synchronous>, transform_indices = @transform_1, window_bounds = array<i64: 256, 256>}, {pipeline_mode = #tpu.pipeline_mode<synchronous>, transform_indices = @transform_2, window_bounds = array<i64: 1, 256>}, {transform_indices = @transform_3, window_bounds = array<i64: 256, 256>}]} {
    %c0 = arith.constant 0 : index
    %c0_0 = arith.constant 0 : index
    %0 = vector.load %arg1[%c0, %c0_0] : memref<256x256xbf16, #tpu.memory_space<vmem>>, vector<256x256xbf16>
    %c0_1 = arith.constant 0 : index
    %c0_2 = arith.constant 0 : index
    %1 = vector.load %arg2[%c0_1, %c0_2] : memref<256x256xbf16, #tpu.memory_space<vmem>>, vector<256x256xbf16>
    %cst = arith.constant dense<0.000000e+00> : vector<256x256xf32>
    %2 = tpu.matmul %0, %1, %cst {dimension_numbers = #tpu.dot_dimension_numbers<[1], [0], [0], [1], [0, 0, 1, 1], [], []>} : vector<256x256xbf16>, vector<256x256xbf16>, vector<256x256xf32> -> vector<256x256xf32>
    %c0_3 = arith.constant 0 : index
    %c0_4 = arith.constant 0 : index
    %3 = vector.load %arg3[%c0_3, %c0_4] : memref<1x256xf32, #tpu.memory_space<vmem>>, vector<1x256xf32>
    %4 = vector.broadcast %3 : vector<1x256xf32> to vector<256x256xf32>
    %5 = arith.addf %2, %4 : vector<256x256xf32>
    %6 = arith.truncf %5 : vector<256x256xf32> to vector<256x256xbf16>
    %c0_5 = arith.constant 0 : index
    %c0_6 = arith.constant 0 : index
    %7 = vector.load %arg4[%c0_5, %c0_6] : memref<256x256xbf16, #tpu.memory_space<vmem>>, vector<256x256xbf16>
    tpu.vector_store %arg4[%c0_5, %c0_6], %6 {strides = array<i32>} : memref<256x256xbf16, #tpu.memory_space<vmem>>, vector<256x256xbf16>,
    return
  }
  func.func @transform_0(%arg0: i32) -> (i32, i32) {
    %c0_i32 = arith.constant 0 : i32
    %c0_i32_0 = arith.constant 0 : i32
    return %arg0, %c0_i32 : i32, i32
  }
  func.func @transform_1(%arg0: i32) -> (i32, i32) {
    %c0_i32 = arith.constant 0 : i32
    %c0_i32_0 = arith.constant 0 : i32
    %c0_i32_1 = arith.constant 0 : i32
    return %c0_i32, %c0_i32_0 : i32, i32
  }
  func.func @transform_2(%arg0: i32) -> (i32, i32) {
    %c0_i32 = arith.constant 0 : i32
    %c0_i32_0 = arith.constant 0 : i32
    %c0_i32_1 = arith.constant 0 : i32
    return %c0_i32, %c0_i32_0 : i32, i32
  }
  func.func @transform_3(%arg0: i32) -> (i32, i32) {
    %c0_i32 = arith.constant 0 : i32
    %c0_i32_0 = arith.constant 0 : i32
    return %arg0, %c0_i32 : i32, i32
  }
}

module attributes {stable_mosaic.version = 11 : i64} {
  func.func @_attn_head_kernel(%arg0: i32, %arg1: i32, %arg2: memref<1x128x128xbf16, #tpu.memory_space<vmem>>, %arg3: memref<1x128x128xbf16, #tpu.memory_space<vmem>>, %arg4: memref<1x128x128xbf16, #tpu.memory_space<vmem>>, %arg5: memref<1x1x128x128xf32, #tpu.memory_space<vmem>>) attributes {dimension_semantics = [#tpu.dimension_semantics<parallel>, #tpu.dimension_semantics<parallel>], iteration_bounds = array<i64: 2, 4>, scalar_prefetch = 0 : i64, scratch_operands = 0 : i64, tpu.core_type = #tpu.core_type<tc>, window_params = [{transform_indices = @transform_0, window_bounds = array<i64: 1, 128, 128>}, {transform_indices = @transform_1, window_bounds = array<i64: 1, 128, 128>}, {transform_indices = @transform_2, window_bounds = array<i64: 1, 128, 128>}, {transform_indices = @transform_3, window_bounds = array<i64: 1, 1, 128, 128>}]} {
    %c0 = arith.constant 0 : index
    %c0_0 = arith.constant 0 : index
    %c0_1 = arith.constant 0 : index
    %0 = vector.load %arg2[%c0, %c0_0, %c0_1] : memref<1x128x128xbf16, #tpu.memory_space<vmem>>, vector<1x128x128xbf16>
    %1 = vector.shape_cast %0 : vector<1x128x128xbf16> to vector<128x128xbf16>
    %c0_2 = arith.constant 0 : index
    %c0_3 = arith.constant 0 : index
    %c0_4 = arith.constant 0 : index
    %2 = vector.load %arg3[%c0_2, %c0_3, %c0_4] : memref<1x128x128xbf16, #tpu.memory_space<vmem>>, vector<1x128x128xbf16>
    %3 = vector.shape_cast %2 : vector<1x128x128xbf16> to vector<128x128xbf16>
    %cst = arith.constant dense<0.000000e+00> : vector<128x128xf32>
    %4 = tpu.matmul %3, %1, %cst {dimension_numbers = #tpu.dot_dimension_numbers<[1], [1], [0], [0], [0, 0, 1, 0], [], []>} : vector<128x128xbf16>, vector<128x128xbf16>, vector<128x128xf32> -> vector<128x128xf32>
    %cst_5 = arith.constant dense<0xFF800000> : vector<128xf32>
    %5 = vector.multi_reduction <maximumf>, %4, %cst_5 [1] : vector<128x128xf32> to vector<128xf32>
    %6 = vector.shape_cast %5 : vector<128xf32> to vector<128x1xf32>
    %7 = vector.broadcast %6 : vector<128x1xf32> to vector<128x128xf32>
    %8 = arith.subf %4, %7 : vector<128x128xf32>
    %9 = math.exp %8 : vector<128x128xf32>
    %cst_6 = arith.constant dense<0.000000e+00> : vector<128xf32>
    %10 = vector.multi_reduction <add>, %9, %cst_6 [1] : vector<128x128xf32> to vector<128xf32>
    %11 = vector.shape_cast %10 : vector<128xf32> to vector<128x1xf32>
    %12 = tpu.reciprocal %11 {approx = true} : vector<128x1xf32> -> vector<128x1xf32>
    %13 = vector.broadcast %12 : vector<128x1xf32> to vector<128x128xf32>
    %14 = arith.mulf %9, %13 : vector<128x128xf32>
    %15 = arith.truncf %14 : vector<128x128xf32> to vector<128x128xbf16>
    %cst_7 = arith.constant dense<0.000000e+00> : vector<128x128xf32>
    %16 = tpu.matmul %15, %1, %cst_7 {dimension_numbers = #tpu.dot_dimension_numbers<[1], [0], [0], [1], [0, 0, 1, 1], [], []>} : vector<128x128xbf16>, vector<128x128xbf16>, vector<128x128xf32> -> vector<128x128xf32>
    %17 = arith.truncf %16 : vector<128x128xf32> to vector<128x128xbf16>
    %c0_8 = arith.constant 0 : index
    %c0_9 = arith.constant 0 : index
    %c0_10 = arith.constant 0 : index
    %18 = vector.load %arg4[%c0_8, %c0_9, %c0_10] : memref<1x128x128xbf16, #tpu.memory_space<vmem>>, vector<1x128x128xbf16>
    %19 = vector.shape_cast %18 : vector<1x128x128xbf16> to vector<128x128xbf16>
    %20 = vector.shape_cast %17 : vector<128x128xbf16> to vector<1x128x128xbf16>
    tpu.vector_store %arg4[%c0_8, %c0_9, %c0_10], %20 {strides = array<i32>} : memref<1x128x128xbf16, #tpu.memory_space<vmem>>, vector<1x128x128xbf16>,
    %c0_11 = arith.constant 0 : index
    %c0_12 = arith.constant 0 : index
    %c0_13 = arith.constant 0 : index
    %c0_14 = arith.constant 0 : index
    %21 = vector.load %arg5[%c0_11, %c0_12, %c0_13, %c0_14] : memref<1x1x128x128xf32, #tpu.memory_space<vmem>>, vector<1x1x128x128xf32>
    %22 = vector.shape_cast %21 : vector<1x1x128x128xf32> to vector<128x128xf32>
    %23 = vector.shape_cast %14 : vector<128x128xf32> to vector<1x1x128x128xf32>
    tpu.vector_store %arg5[%c0_11, %c0_12, %c0_13, %c0_14], %23 {strides = array<i32>} : memref<1x1x128x128xf32, #tpu.memory_space<vmem>>, vector<1x1x128x128xf32>,
    return
  }
  func.func @transform_0(%arg0: i32, %arg1: i32) -> (i32, i32, i32) {
    %c0_i32 = arith.constant 0 : i32
    %c0_i32_0 = arith.constant 0 : i32
    return %arg1, %c0_i32, %arg0 : i32, i32, i32
  }
  func.func @transform_1(%arg0: i32, %arg1: i32) -> (i32, i32, i32) {
    %c0_i32 = arith.constant 0 : i32
    %c0_i32_0 = arith.constant 0 : i32
    return %arg1, %c0_i32, %arg0 : i32, i32, i32
  }
  func.func @transform_2(%arg0: i32, %arg1: i32) -> (i32, i32, i32) {
    %c0_i32 = arith.constant 0 : i32
    %c0_i32_0 = arith.constant 0 : i32
    return %arg1, %c0_i32, %arg0 : i32, i32, i32
  }
  func.func @transform_3(%arg0: i32, %arg1: i32) -> (i32, i32, i32, i32) {
    %c0_i32 = arith.constant 0 : i32
    %c0_i32_0 = arith.constant 0 : i32
    %c0_i32_1 = arith.constant 0 : i32
    return %arg0, %arg1, %c0_i32, %c0_i32_0 : i32, i32, i32, i32
  }
}

module attributes {stable_mosaic.version = 11 : i64} {
  func.func @_linear_kernel(%arg0: i32, %arg1: memref<256x256xbf16, #tpu.memory_space<vmem>>, %arg2: memref<256x256xbf16, #tpu.memory_space<vmem>>, %arg3: memref<1x256xf32, #tpu.memory_space<vmem>>, %arg4: memref<256x256xf32, #tpu.memory_space<vmem>>) attributes {dimension_semantics = [#tpu.dimension_semantics<parallel>], iteration_bounds = array<i64: 2>, scalar_prefetch = 0 : i64, scratch_operands = 0 : i64, tpu.core_type = #tpu.core_type<tc>, window_params = [{transform_indices = @transform_0, window_bounds = array<i64: 256, 256>}, {pipeline_mode = #tpu.pipeline_mode<synchronous>, transform_indices = @transform_1, window_bounds = array<i64: 256, 256>}, {pipeline_mode = #tpu.pipeline_mode<synchronous>, transform_indices = @transform_2, window_bounds = array<i64: 1, 256>}, {transform_indices = @transform_3, window_bounds = array<i64: 256, 256>}]} {
    %c0 = arith.constant 0 : index
    %c0_0 = arith.constant 0 : index
    %0 = vector.load %arg1[%c0, %c0_0] : memref<256x256xbf16, #tpu.memory_space<vmem>>, vector<256x256xbf16>
    %c0_1 = arith.constant 0 : index
    %c0_2 = arith.constant 0 : index
    %1 = vector.load %arg2[%c0_1, %c0_2] : memref<256x256xbf16, #tpu.memory_space<vmem>>, vector<256x256xbf16>
    %cst = arith.constant dense<0.000000e+00> : vector<256x256xf32>
    %2 = tpu.matmul %0, %1, %cst {dimension_numbers = #tpu.dot_dimension_numbers<[1], [0], [0], [1], [0, 0, 1, 1], [], []>} : vector<256x256xbf16>, vector<256x256xbf16>, vector<256x256xf32> -> vector<256x256xf32>
    %c0_3 = arith.constant 0 : index
    %c0_4 = arith.constant 0 : index
    %3 = vector.load %arg3[%c0_3, %c0_4] : memref<1x256xf32, #tpu.memory_space<vmem>>, vector<1x256xf32>
    %4 = vector.broadcast %3 : vector<1x256xf32> to vector<256x256xf32>
    %5 = arith.addf %2, %4 : vector<256x256xf32>
    %c0_5 = arith.constant 0 : index
    %c0_6 = arith.constant 0 : index
    %6 = vector.load %arg4[%c0_5, %c0_6] : memref<256x256xf32, #tpu.memory_space<vmem>>, vector<256x256xf32>
    tpu.vector_store %arg4[%c0_5, %c0_6], %5 {strides = array<i32>} : memref<256x256xf32, #tpu.memory_space<vmem>>, vector<256x256xf32>,
    return
  }
  func.func @transform_0(%arg0: i32) -> (i32, i32) {
    %c0_i32 = arith.constant 0 : i32
    %c0_i32_0 = arith.constant 0 : i32
    return %arg0, %c0_i32 : i32, i32
  }
  func.func @transform_1(%arg0: i32) -> (i32, i32) {
    %c0_i32 = arith.constant 0 : i32
    %c0_i32_0 = arith.constant 0 : i32
    %c0_i32_1 = arith.constant 0 : i32
    return %c0_i32, %c0_i32_0 : i32, i32
  }
  func.func @transform_2(%arg0: i32) -> (i32, i32) {
    %c0_i32 = arith.constant 0 : i32
    %c0_i32_0 = arith.constant 0 : i32
    %c0_i32_1 = arith.constant 0 : i32
    return %c0_i32, %c0_i32_0 : i32, i32
  }
  func.func @transform_3(%arg0: i32) -> (i32, i32) {
    %c0_i32 = arith.constant 0 : i32
    %c0_i32_0 = arith.constant 0 : i32
    return %arg0, %c0_i32 : i32, i32
  }
}

</mosaic_0001>

<llo_original>
// kernel: attention_forward.4
$region0: #{attention_forward.4}
  #allocation0 [shape = 'u32[]', space=smem, size = 0x4, offset = 0x4, fixed_abs, tag = 'smem constant byte address 0x4 - core index']
  #allocation1 [shape = 'u32[144,128]{1,0:T(1,128)}', space=vmem, size = 0x12000, scoped, tag = 'internal scratch']
  %s0 = inlined_call_operand.vmem [shape: bf16[512,256], index: 0, kind: input, shape index: {}]
  %s1 = inlined_call_operand.vmem [shape: bf16[256,256], index: 1, kind: input, shape index: {}]
  %s2 = inlined_call_operand.vmem [shape: f32[1,256], index: 2, kind: input, shape index: {}]
  %s3 = inlined_call_operand.vmem [shape: bf16[512,256], index: 3, kind: output, shape index: {}]
  %s4 = sld [smem:[#allocation0]]
  $region45: #{attention_forward.4} parent=0
    _
  %s6 = ssub.s32 1, %s4
  %s7 = scalar_select 0, %s6, %s4
  loop: start=0, step=1, limit=4
  $region2: #{attention_forward.4} parent=0 // loop_pre_header
    _
  $region3: #{attention_forward.4} parent=0 // loop_header
    %s9 = sphi 0, %s13
    %p10 = scmp.ge.s32.totalorder %s9, 4
    %s19 = sphi 0, %s21
    %s22 = sphi 0, %s19
    %s23 = sphi 0, %s22
    %s39 = sphi 0, %s23
    %s43 = sphi 0, %s43
    %s45 = sphi 0, %s43
    %s46 = sphi 0, %s45
    %s60 = sphi 0, %s46
    %s64 = sphi 0, %s64
    %s66 = sphi 0, %s64
    %s67 = sphi 0, %s66
    %s81 = sphi 0, %s67
    %s87 = sphi 0, %s89
    %s90 = sphi 0, %s87
    %s91 = sphi 0, %s90
    %s107 = sphi 0, %s91
  $region4: #{attention_forward.4} parent=0 // loop_header_branch
    %12 = sbr.rel (%p10) target = $region8
  $region5: #{attention_forward.4} parent=0 // loop_body
    %s14 = ssub.s32 %s9, 1
    %s15 = ssub.s32 %s9, 2
    %s16 = sadd.s32 %s9, 1
    %s17 = ssub.s32 %s9, %s16
    %p18 = scmp.eq.s32.totalorder %s17, 0
    %s20 = sadd.s32 %s19, 1
    %s21 = scalar_select %p18, %s19, %s20
    %p24 = pneg %p18
    %p25 = scmp.eq.s32.totalorder %s9, 1
    %p26 = por %p24, %p25
    %p27 = scmp.ne.s32.totalorder %s19, %s22
    %p28 = scmp.eq.s32.totalorder %s9, 0
    %p29 = por %p27, %p28
    %p30 = scmp.ne.s32.totalorder %s19, %s22
    %p31 = scmp.eq.s32.totalorder %s14, 1
    %p32 = por %p30, %p31
    %p33 = scmp.ne.s32.totalorder %s22, %s23
    %p34 = scmp.eq.s32.totalorder %s14, 0
    %p35 = por %p33, %p34
    %p36 = scmp.ne.s32.totalorder %s22, %s23
    %p37 = scmp.eq.s32.totalorder %s15, 1
    %p38 = por %p36, %p37
    %p40 = scmp.ne.s32.totalorder %s23, %s39
    %p41 = scmp.eq.s32.totalorder %s15, 0
    %p42 = por %p40, %p41
    %s44 = sadd.s32 %s43, 1
    %p47 = scmp.eq.s32.totalorder %s9, 1
    %p48 = scmp.ne.s32.totalorder %s43, %s45
    %p49 = scmp.eq.s32.totalorder %s9, 0
    %p50 = por %p48, %p49
    %p51 = scmp.ne.s32.totalorder %s43, %s45
    %p52 = scmp.eq.s32.totalorder %s14, 1
    %p53 = por %p51, %p52
    %p54 = scmp.ne.s32.totalorder %s45, %s46
    %p55 = scmp.eq.s32.totalorder %s14, 0
    %p56 = por %p54, %p55
    %p57 = scmp.ne.s32.totalorder %s45, %s46
    %p58 = scmp.eq.s32.totalorder %s15, 1
    %p59 = por %p57, %p58
    %p61 = scmp.ne.s32.totalorder %s46, %s60
    %p62 = scmp.eq.s32.totalorder %s15, 0
    %p63 = por %p61, %p62
    %s65 = sadd.s32 %s64, 1
    %p68 = scmp.eq.s32.totalorder %s9, 1
    %p69 = scmp.ne.s32.totalorder %s64, %s66
    %p70 = scmp.eq.s32.totalorder %s9, 0
    %p71 = por %p69, %p70
    %p72 = scmp.ne.s32.totalorder %s64, %s66
    %p73 = scmp.eq.s32.totalorder %s14, 1
    %p74 = por %p72, %p73
    %p75 = scmp.ne.s32.totalorder %s66, %s67
    %p76 = scmp.eq.s32.totalorder %s14, 0
    %p77 = por %p75, %p76
    %p78 = scmp.ne.s32.totalorder %s66, %s67
    %p79 = scmp.eq.s32.totalorder %s15, 1
    %p80 = por %p78, %p79
    %p82 = scmp.ne.s32.totalorder %s67, %s81
    %p83 = scmp.eq.s32.totalorder %s15, 0
    %p84 = por %p82, %p83
    %s85 = ssub.s32 %s9, %s16
    %p86 = scmp.eq.s32.totalorder %s85, 0
    %s88 = sadd.s32 %s87, 1
    %s89 = scalar_select %p86, %s87, %s88
    %p92 = pneg %p86
    %p93 = scmp.eq.s32.totalorder %s9, 1
    %p94 = por %p92, %p93
    %p95 = scmp.ne.s32.totalorder %s87, %s90
    %p96 = scmp.eq.s32.totalorder %s9, 0
    %p97 = por %p95, %p96
    %p98 = scmp.ne.s32.totalorder %s87, %s90
    %p99 = scmp.eq.s32.totalorder %s14, 1
    %p100 = por %p98, %p99
    %p101 = scmp.ne.s32.totalorder %s90, %s91
    %p102 = scmp.eq.s32.totalorder %s14, 0
    %p103 = por %p101, %p102
    %p104 = scmp.ne.s32.totalorder %s90, %s91
    %p105 = scmp.eq.s32.totalorder %s15, 1
    %p106 = por %p104, %p105
    %p108 = scmp.ne.s32.totalorder %s91, %s107
    %p109 = scmp.eq.s32.totalorder %s15, 0
    %p110 = por %p108, %p109
    %p111 = scmp.le.s32.totalorder 1, %s9
    %p112 = scmp.lt.s32.totalorder %s9, 3
    %p113 = pnand %p111, %p112
    %p114 = pneg %p113
    // Predicated region
    $region9: #{attention_forward.4} parent=5 // pred_check
      _
    $region10: #{attention_forward.4} parent=5 // pred_check_branch
      %116 = sbr.rel (%p113) target = $region12
    $region11: #{attention_forward.4} parent=5 // pred_region
      %s117 = ssub.s32 %s9, 1
      // Predicated region
      $region13: #{attention_forward.4} parent=11 // pred_check
        %p118 = pneg %p56
      $region14: #{attention_forward.4} parent=11 // pred_check_branch
        %120 = sbr.rel (%p118) target = $region16
      $region15: #{attention_forward.4} parent=11 // pred_region
        _
      $region16: #{attention_forward.4} parent=11 // pred_fallthru
        _
      // Predicated region
      $region17: #{attention_forward.4} parent=11 // pred_check
        %p121 = pneg %p77
      $region18: #{attention_forward.4} parent=11 // pred_check_branch
        %123 = sbr.rel (%p121) target = $region20
      $region19: #{attention_forward.4} parent=11 // pred_region
        _
      $region20: #{attention_forward.4} parent=11 // pred_fallthru
        _
    $region12: #{attention_forward.4} parent=5 // pred_fallthru
      _
    %p124 = scmp.lt.s32.totalorder %s9, 2
    // Predicated region
    $region21: #{attention_forward.4} parent=5 // pred_check
      %p125 = pneg %p124
    $region22: #{attention_forward.4} parent=5 // pred_check_branch
      %127 = sbr.rel (%p125) target = $region24
    $region23: #{attention_forward.4} parent=5 // pred_region
      // Predicated region
      $region25: #{attention_forward.4} parent=23 // pred_check
        %p128 = pneg %p29
      $region26: #{attention_forward.4} parent=23 // pred_check_branch
        %130 = sbr.rel (%p128) target = $region28
      $region27: #{attention_forward.4} parent=23 // pred_region
        %s131 = smul.u32 32, %s9
        %p132 = scmp.lt.s32.totalorder %s131, 63
        %s133 = scalar_select %p132, %s131, 63
        %s134 = smul.addr %s133, 2
        %s135 = smul.addr %s134, 4
        %s136 = scalar_lea.vmem %s0, %s135
        %s137 = smul.u32 32, %s9
      $region28: #{attention_forward.4} parent=23 // pred_fallthru
        _
    $region24: #{attention_forward.4} parent=5 // pred_fallthru
      _
    %p138 = scmp.le.s32.totalorder 1, %s9
    %p139 = scmp.lt.s32.totalorder %s9, 3
    %p140 = pnand %p138, %p139
    %p141 = pneg %p140
    // Predicated region
    $region29: #{attention_forward.4} parent=5 // pred_check
      _
    $region30: #{attention_forward.4} parent=5 // pred_check_branch
      %143 = sbr.rel (%p140) target = $region32
    $region31: #{attention_forward.4} parent=5 // pred_region
      %s144 = ssub.s32 %s9, 1
      %s145 = smul.u32 32, %s14
      %p146 = scmp.lt.s32.totalorder %s145, 63
      %s147 = scalar_select %p146, %s145, 63
      %s148 = smul.addr %s147, 2
      %s149 = smul.addr %s148, 4
      %s150 = scalar_lea.vmem %s0, %s149
      %p151 = pneg %p35
      %p152 = pneg %p32
      %p153 = pneg %p56
      %p154 = pneg %p53
      %p155 = pneg %p77
      %p156 = pneg %p74
      %p157 = pneg %p103
      %p158 = pneg %p100
      %s159 = smul.u32 32, %s14
      %p160 = scmp.lt.s32.totalorder %s159, 63
      %s161 = scalar_select %p160, %s159, 63
      %s162 = smul.addr %s161, 2
      %s163 = smul.addr %s162, 4
      %s164 = scalar_lea.vmem %s3, %s163
      %s165 = smul.u32 32, %s14
      %p166 = scmp.lt.s32.totalorder %s165, 63
      %s167 = scalar_select %p166, %s165, 63
      %s168 = smul.addr %s167, 2
      %s169 = smul.addr %s168, 4
      %s170 = scalar_lea.vmem %s0, %s169
      %s171 = smul.u32 32, %s14
      %s172 = smul.u32 32, %s14
      %p173 = scmp.lt.s32.totalorder %s172, 63
      %s174 = scalar_select %p173, %s172, 63
      %s175 = smul.addr %s174, 2
      %s176 = smul.addr %s175, 4
      %s177 = scalar_lea.vmem %s3, %s176
      %s178 = smul.u32 32, %s14
      %v179 = vld [vmem:[%s170] sm:$0xff]
      %v180 = vld [vmem:[%s170 + $0x8] sm:$0xff]
      %v181 = vld [vmem:[%s170 + $0x10] sm:$0xff]
      %v182 = vld [vmem:[%s170 + $0x18] sm:$0xff]
      %v183 = vld [vmem:[%s170 + $0x20] sm:$0xff]
      %v184 = vld [vmem:[%s170 + $0x28] sm:$0xff]
      %v185 = vld [vmem:[%s170 + $0x30] sm:$0xff]
      %v186 = vld [vmem:[%s170 + $0x38] sm:$0xff]
      %v187 = vld [vmem:[%s170 + $0x40] sm:$0xff]
      %v188 = vld [vmem:[%s170 + $0x48] sm:$0xff]
      %v189 = vld [vmem:[%s170 + $0x50] sm:$0xff]
      %v190 = vld [vmem:[%s170 + $0x58] sm:$0xff]
      %v191 = vld [vmem:[%s170 + $0x60] sm:$0xff]
      %v192 = vld [vmem:[%s170 + $0x68] sm:$0xff]
      %v193 = vld [vmem:[%s170 + $0x70] sm:$0xff]
      %v194 = vld [vmem:[%s170 + $0x78] sm:$0xff]
      %v195 = vld [vmem:[%s170 + $0x80] sm:$0xff]
      %v196 = vld [vmem:[%s170 + $0x88] sm:$0xff]
      %v197 = vld [vmem:[%s170 + $0x90] sm:$0xff]
      %v198 = vld [vmem:[%s170 + $0x98] sm:$0xff]
      %v199 = vld [vmem:[%s170 + $0xa0] sm:$0xff]
      %v200 = vld [vmem:[%s170 + $0xa8] sm:$0xff]
      %v201 = vld [vmem:[%s170 + $0xb0] sm:$0xff]
      %v202 = vld [vmem:[%s170 + $0xb8] sm:$0xff]
      %v203 = vld [vmem:[%s170 + $0xc0] sm:$0xff]
      %v204 = vld [vmem:[%s170 + $0xc8] sm:$0xff]
      %v205 = vld [vmem:[%s170 + $0xd0] sm:$0xff]
      %v206 = vld [vmem:[%s170 + $0xd8] sm:$0xff]
      %v207 = vld [vmem:[%s170 + $0xe0] sm:$0xff]
      %v208 = vld [vmem:[%s170 + $0xe8] sm:$0xff]
      %v209 = vld [vmem:[%s170 + $0xf0] sm:$0xff]
      %v210 = vld [vmem:[%s170 + $0xf8] sm:$0xff]
      %v211 = vld [vmem:[%s1] sm:$0xff]
      %v212 = vld [vmem:[%s1 + $0x8] sm:$0xff]
      %v213 = vld [vmem:[%s1 + $0x10] sm:$0xff]
      %v214 = vld [vmem:[%s1 + $0x18] sm:$0xff]
      %v215 = vld [vmem:[%s1 + $0x20] sm:$0xff]
      %v216 = vld [vmem:[%s1 + $0x28] sm:$0xff]
      %v217 = vld [vmem:[%s1 + $0x30] sm:$0xff]
      %v218 = vld [vmem:[%s1 + $0x38] sm:$0xff]
      %v219 = vld [vmem:[%s1 + $0x40] sm:$0xff]
      %v220 = vld [vmem:[%s1 + $0x48] sm:$0xff]
      %v221 = vld [vmem:[%s1 + $0x50] sm:$0xff]
      %v222 = vld [vmem:[%s1 + $0x58] sm:$0xff]
      %v223 = vld [vmem:[%s1 + $0x60] sm:$0xff]
      %v224 = vld [vmem:[%s1 + $0x68] sm:$0xff]
      %v225 = vld [vmem:[%s1 + $0x70] sm:$0xff]
      %v226 = vld [vmem:[%s1 + $0x78] sm:$0xff]
      %v227 = vld [vmem:[%s1 + $0x80] sm:$0xff]
      %v228 = vld [vmem:[%s1 + $0x88] sm:$0xff]
      %v229 = vld [vmem:[%s1 + $0x90] sm:$0xff]
      %v230 = vld [vmem:[%s1 + $0x98] sm:$0xff]
      %v231 = vld [vmem:[%s1 + $0xa0] sm:$0xff]
      %v232 = vld [vmem:[%s1 + $0xa8] sm:$0xff]
      %v233 = vld [vmem:[%s1 + $0xb0] sm:$0xff]
      %v234 = vld [vmem:[%s1 + $0xb8] sm:$0xff]
      %v235 = vld [vmem:[%s1 + $0xc0] sm:$0xff]
      %v236 = vld [vmem:[%s1 + $0xc8] sm:$0xff]
      %v237 = vld [vmem:[%s1 + $0xd0] sm:$0xff]
      %v238 = vld [vmem:[%s1 + $0xd8] sm:$0xff]
      %v239 = vld [vmem:[%s1 + $0xe0] sm:$0xff]
      %v240 = vld [vmem:[%s1 + $0xe8] sm:$0xff]
      %v241 = vld [vmem:[%s1 + $0xf0] sm:$0xff]
      %v242 = vld [vmem:[%s1 + $0xf8] sm:$0xff]
      %v243 = vld [vmem:[%s2] sm:$0x3]
      %v245 = vlaneseq
      %v246 = vshrl.u32 %v245, 7
      %v247 = vsub.s32 0, %v246
      %v248 = vrot.slane %v243, %v247
      %v249 = vlaneseq
      %v250 = vshrl.u32 %v249, 7
      %v251 = vsub.s32 1, %v250
      %v252 = vrot.slane %v243, %v251
      %v287 = vunpack.c.l.b16 %v179
      %v288 = vunpack.c.h.b16 %v179
      %v289 = vunpack.c.l.b16 %v180
      %v290 = vunpack.c.h.b16 %v180
      %v291 = vunpack.c.l.b16 %v181
      %v292 = vunpack.c.h.b16 %v181
      %v293 = vunpack.c.l.b16 %v182
      %v294 = vunpack.c.h.b16 %v182
      %v295 = vunpack.c.l.b16 %v183
      %v296 = vunpack.c.h.b16 %v183
      %v297 = vunpack.c.l.b16 %v184
      %v298 = vunpack.c.h.b16 %v184
      %v299 = vunpack.c.l.b16 %v185
      %v300 = vunpack.c.h.b16 %v185
      %v301 = vunpack.c.l.b16 %v186
      %v302 = vunpack.c.h.b16 %v186
      %v303 = vunpack.c.l.b16 %v187
      %v304 = vunpack.c.h.b16 %v187
      %v305 = vunpack.c.l.b16 %v188
      %v306 = vunpack.c.h.b16 %v188
      %v307 = vunpack.c.l.b16 %v189
      %v308 = vunpack.c.h.b16 %v189
      %v309 = vunpack.c.l.b16 %v190
      %v310 = vunpack.c.h.b16 %v190
      %v311 = vunpack.c.l.b16 %v191
      %v312 = vunpack.c.h.b16 %v191
      %v313 = vunpack.c.l.b16 %v192
      %v314 = vunpack.c.h.b16 %v192
      %v315 = vunpack.c.l.b16 %v193
      %v316 = vunpack.c.h.b16 %v193
      %v317 = vunpack.c.l.b16 %v194
      %v318 = vunpack.c.h.b16 %v194
      %v319 = vunpack.c.l.b16 %v195
      %v320 = vunpack.c.h.b16 %v195
      %v321 = vunpack.c.l.b16 %v196
      %v322 = vunpack.c.h.b16 %v196
      %v323 = vunpack.c.l.b16 %v197
      %v324 = vunpack.c.h.b16 %v197
      %v325 = vunpack.c.l.b16 %v198
      %v326 = vunpack.c.h.b16 %v198
      %v327 = vunpack.c.l.b16 %v199
      %v328 = vunpack.c.h.b16 %v199
      %v329 = vunpack.c.l.b16 %v200
      %v330 = vunpack.c.h.b16 %v200
      %v331 = vunpack.c.l.b16 %v201
      %v332 = vunpack.c.h.b16 %v201
      %v333 = vunpack.c.l.b16 %v202
      %v334 = vunpack.c.h.b16 %v202
      %v335 = vunpack.c.l.b16 %v203
      %v336 = vunpack.c.h.b16 %v203
      %v337 = vunpack.c.l.b16 %v204
      %v338 = vunpack.c.h.b16 %v204
      %v339 = vunpack.c.l.b16 %v205
      %v340 = vunpack.c.h.b16 %v205
      %v341 = vunpack.c.l.b16 %v206
      %v342 = vunpack.c.h.b16 %v206
      %v343 = vunpack.c.l.b16 %v207
      %v344 = vunpack.c.h.b16 %v207
      %v345 = vunpack.c.l.b16 %v208
      %v346 = vunpack.c.h.b16 %v208
      %v347 = vunpack.c.l.b16 %v209
      %v348 = vunpack.c.h.b16 %v209
      %v349 = vunpack.c.l.b16 %v210
      %v350 = vunpack.c.h.b16 %v210
      %v351 = vpack.c.b16 %v289, %v287
      %v352 = vpack.c.b16 %v290, %v288
      %v353 = vpack.c.b16 %v293, %v291
      %v354 = vpack.c.b16 %v294, %v292
      %v355 = vpack.c.b16 %v297, %v295
      %v356 = vpack.c.b16 %v298, %v296
      %v357 = vpack.c.b16 %v301, %v299
      %v358 = vpack.c.b16 %v302, %v300
      %v359 = vpack.c.b16 %v305, %v303
      %v360 = vpack.c.b16 %v306, %v304
      %v361 = vpack.c.b16 %v309, %v307
      %v362 = vpack.c.b16 %v310, %v308
      %v363 = vpack.c.b16 %v313, %v311
      %v364 = vpack.c.b16 %v314, %v312
      %v365 = vpack.c.b16 %v317, %v315
      %v366 = vpack.c.b16 %v318, %v316
      %v367 = vpack.c.b16 %v321, %v319
      %v368 = vpack.c.b16 %v322, %v320
      %v369 = vpack.c.b16 %v325, %v323
      %v370 = vpack.c.b16 %v326, %v324
      %v371 = vpack.c.b16 %v329, %v327
      %v372 = vpack.c.b16 %v330, %v328
      %v373 = vpack.c.b16 %v333, %v331
      %v374 = vpack.c.b16 %v334, %v332
      %v375 = vpack.c.b16 %v337, %v335
      %v376 = vpack.c.b16 %v338, %v336
      %v377 = vpack.c.b16 %v341, %v339
      %v378 = vpack.c.b16 %v342, %v340
      %v379 = vpack.c.b16 %v345, %v343
      %v380 = vpack.c.b16 %v346, %v344
      %v381 = vpack.c.b16 %v349, %v347
      %v382 = vpack.c.b16 %v350, %v348
      %v447 = vunpack.c.l.b16 %v211
      %v448 = vunpack.c.h.b16 %v211
      %v449 = vunpack.c.l.b16 %v212
      %v450 = vunpack.c.h.b16 %v212
      %v451 = vunpack.c.l.b16 %v213
      %v452 = vunpack.c.h.b16 %v213
      %v453 = vunpack.c.l.b16 %v214
      %v454 = vunpack.c.h.b16 %v214
      %v455 = vunpack.c.l.b16 %v215
      %v456 = vunpack.c.h.b16 %v215
      %v457 = vunpack.c.l.b16 %v216
      %v458 = vunpack.c.h.b16 %v216
      %v459 = vunpack.c.l.b16 %v217
      %v460 = vunpack.c.h.b16 %v217
      %v461 = vunpack.c.l.b16 %v218
      %v462 = vunpack.c.h.b16 %v218
      %v463 = vunpack.c.l.b16 %v219
      %v464 = vunpack.c.h.b16 %v219
      %v465 = vunpack.c.l.b16 %v220
      %v466 = vunpack.c.h.b16 %v220
      %v467 = vunpack.c.l.b16 %v221
      %v468 = vunpack.c.h.b16 %v221
      %v469 = vunpack.c.l.b16 %v222
      %v470 = vunpack.c.h.b16 %v222
      %v471 = vunpack.c.l.b16 %v223
      %v472 = vunpack.c.h.b16 %v223
      %v473 = vunpack.c.l.b16 %v224
      %v474 = vunpack.c.h.b16 %v224
      %v475 = vunpack.c.l.b16 %v225
      %v476 = vunpack.c.h.b16 %v225
      %v477 = vunpack.c.l.b16 %v226
      %v478 = vunpack.c.h.b16 %v226
      %v479 = vunpack.c.l.b16 %v227
      %v480 = vunpack.c.h.b16 %v227
      %v481 = vunpack.c.l.b16 %v228
      %v482 = vunpack.c.h.b16 %v228
      %v483 = vunpack.c.l.b16 %v229
      %v484 = vunpack.c.h.b16 %v229
      %v485 = vunpack.c.l.b16 %v230
      %v486 = vunpack.c.h.b16 %v230
      %v487 = vunpack.c.l.b16 %v231
      %v488 = vunpack.c.h.b16 %v231
      %v489 = vunpack.c.l.b16 %v232
      %v490 = vunpack.c.h.b16 %v232
      %v491 = vunpack.c.l.b16 %v233
      %v492 = vunpack.c.h.b16 %v233
      %v493 = vunpack.c.l.b16 %v234
      %v494 = vunpack.c.h.b16 %v234
      %v495 = vunpack.c.l.b16 %v235
      %v496 = vunpack.c.h.b16 %v235
      %v497 = vunpack.c.l.b16 %v236
      %v498 = vunpack.c.h.b16 %v236
      %v499 = vunpack.c.l.b16 %v237
      %v500 = vunpack.c.h.b16 %v237
      %v501 = vunpack.c.l.b16 %v238
      %v502 = vunpack.c.h.b16 %v238
      %v503 = vunpack.c.l.b16 %v239
      %v504 = vunpack.c.h.b16 %v239
      %v505 = vunpack.c.l.b16 %v240
      %v506 = vunpack.c.h.b16 %v240
      %v507 = vunpack.c.l.b16 %v241
      %v508 = vunpack.c.h.b16 %v241
      %v509 = vunpack.c.l.b16 %v242
      %v510 = vunpack.c.h.b16 %v242
      %v511 = vpack.c.b16 %v449, %v447
      %v512 = vpack.c.b16 %v450, %v448
      %v513 = vpack.c.b16 %v453, %v451
      %v514 = vpack.c.b16 %v454, %v452
      %v515 = vpack.c.b16 %v457, %v455
      %v516 = vpack.c.b16 %v458, %v456
      %v517 = vpack.c.b16 %v461, %v459
      %v518 = vpack.c.b16 %v462, %v460
      %v519 = vpack.c.b16 %v465, %v463
      %v520 = vpack.c.b16 %v466, %v464
      %v521 = vpack.c.b16 %v469, %v467
      %v522 = vpack.c.b16 %v470, %v468
      %v523 = vpack.c.b16 %v473, %v471
      %v524 = vpack.c.b16 %v474, %v472
      %v525 = vpack.c.b16 %v477, %v475
      %v526 = vpack.c.b16 %v478, %v476
      %v527 = vpack.c.b16 %v481, %v479
      %v528 = vpack.c.b16 %v482, %v480
      %v529 = vpack.c.b16 %v485, %v483
      %v530 = vpack.c.b16 %v486, %v484
      %v531 = vpack.c.b16 %v489, %v487
      %v532 = vpack.c.b16 %v490, %v488
      %v533 = vpack.c.b16 %v493, %v491
      %v534 = vpack.c.b16 %v494, %v492
      %v535 = vpack.c.b16 %v497, %v495
      %v536 = vpack.c.b16 %v498, %v496
      %v537 = vpack.c.b16 %v501, %v499
      %v538 = vpack.c.b16 %v502, %v500
      %v539 = vpack.c.b16 %v505, %v503
      %v540 = vpack.c.b16 %v506, %v504
      %v541 = vpack.c.b16 %v509, %v507
      %v542 = vpack.c.b16 %v510, %v508
      %575 = vmatprep.subr.bf16.mxu0 %v512
      %576 = vmatpush1.bf16.msra.mxu0 %v511
      %577 = vmatprep.subr.bf16.mxu0 %v514
      %578 = vmatpush1.bf16.msra.mxu0 %v513
      %579 = vmatprep.subr.bf16.mxu0 %v516
      %580 = vmatpush1.bf16.msra.mxu0 %v515
      %581 = vmatprep.subr.bf16.mxu0 %v518
      %582 = vmatpush1.bf16.msra.mxu0 %v517
      %583 = vmatprep.subr.bf16.mxu0 %v520
      %584 = vmatpush1.bf16.msra.mxu0 %v519
      %585 = vmatprep.subr.bf16.mxu0 %v522
      %586 = vmatpush1.bf16.msra.mxu0 %v521
      %587 = vmatprep.subr.bf16.mxu0 %v524
      %588 = vmatpush1.bf16.msra.mxu0 %v523
      %589 = vmatprep.subr.bf16.mxu0 %v526
      %590 = vmatpush1.bf16.msra.mxu0 %v525
      %591 = vmatprep.subr.bf16.mxu0 %v528
      %592 = vmatpush1.bf16.msra.mxu0 %v527
      %593 = vmatprep.subr.bf16.mxu0 %v530
      %594 = vmatpush1.bf16.msra.mxu0 %v529
      %595 = vmatprep.subr.bf16.mxu0 %v532
      %596 = vmatpush1.bf16.msra.mxu0 %v531
      %597 = vmatprep.subr.bf16.mxu0 %v534
      %598 = vmatpush1.bf16.msra.mxu0 %v533
      %599 = vmatprep.subr.bf16.mxu0 %v536
      %600 = vmatpush1.bf16.msra.mxu0 %v535
      %601 = vmatprep.subr.bf16.mxu0 %v538
      %602 = vmatpush1.bf16.msra.mxu0 %v537
      %603 = vmatprep.subr.bf16.mxu0 %v540
      %604 = vmatpush1.bf16.msra.mxu0 %v539
      %605 = vmatprep.subr.bf16.mxu0 %v542
      %606 = vmatpush1.bf16.msra.mxu0 %v541
      %607 = vmatprep.mubr.bf16.mxu0 %v352
      %608 = vmatmul.mubr.bf16.gmra.mrb[0].mxu0 %v351
      %v609 = vpop.f32.mrb[0].mxu0
      %v610 = vadd.f32 %v248, %v609
      %v611 = vpop.f32.mrb[0].mxu0
      %v612 = vadd.f32 %v252, %v611
      %v613 = vpop.f32.mrb[0].mxu0
      %v614 = vadd.f32 %v248, %v613
      %v615 = vpop.f32.mrb[0].mxu0
      %v616 = vadd.f32 %v252, %v615
      %617 = vmatprep.mubr.bf16.mxu0 %v354
      %618 = vmatmul.mubr.bf16.gmra.mrb[0].mxu0 %v353
      %v619 = vpop.f32.mrb[0].mxu0
      %v620 = vadd.f32 %v248, %v619
      %v621 = vpop.f32.mrb[0].mxu0
      %v622 = vadd.f32 %v252, %v621
      %v623 = vpop.f32.mrb[0].mxu0
      %v624 = vadd.f32 %v248, %v623
      %v625 = vpop.f32.mrb[0].mxu0
      %v626 = vadd.f32 %v252, %v625
      %627 = vmatprep.mubr.bf16.mxu0 %v356
      %628 = vmatmul.mubr.bf16.gmra.mrb[0].mxu0 %v355
      %v629 = vpop.f32.mrb[0].mxu0
      %v630 = vadd.f32 %v248, %v629
      %v631 = vpop.f32.mrb[0].mxu0
      %v632 = vadd.f32 %v252, %v631
      %v633 = vpop.f32.mrb[0].mxu0
      %v634 = vadd.f32 %v248, %v633
      %v635 = vpop.f32.mrb[0].mxu0
      %v636 = vadd.f32 %v252, %v635
      %637 = vmatprep.mubr.bf16.mxu0 %v358
      %638 = vmatmul.mubr.bf16.gmra.mrb[0].mxu0 %v357
      %v639 = vpop.f32.mrb[0].mxu0
      %v640 = vadd.f32 %v248, %v639
      %v641 = vpop.f32.mrb[0].mxu0
      %v642 = vadd.f32 %v252, %v641
      %v643 = vpop.f32.mrb[0].mxu0
      %v644 = vadd.f32 %v248, %v643
      %v645 = vpop.f32.mrb[0].mxu0
      %v646 = vadd.f32 %v252, %v645
      %647 = vmatprep.mubr.bf16.mxu0 %v360
      %648 = vmatmul.mubr.bf16.gmra.mrb[0].mxu0 %v359
      %v649 = vpop.f32.mrb[0].mxu0
      %v650 = vadd.f32 %v248, %v649
      %v651 = vpop.f32.mrb[0].mxu0
      %v652 = vadd.f32 %v252, %v651
      %v653 = vpop.f32.mrb[0].mxu0
      %v654 = vadd.f32 %v248, %v653
      %v655 = vpop.f32.mrb[0].mxu0
      %v656 = vadd.f32 %v252, %v655
      %657 = vmatprep.mubr.bf16.mxu0 %v362
      %658 = vmatmul.mubr.bf16.gmra.mrb[0].mxu0 %v361
      %v659 = vpop.f32.mrb[0].mxu0
      %v660 = vadd.f32 %v248, %v659
      %v661 = vpop.f32.mrb[0].mxu0
      %v662 = vadd.f32 %v252, %v661
      %v663 = vpop.f32.mrb[0].mxu0
      %v664 = vadd.f32 %v248, %v663
      %v665 = vpop.f32.mrb[0].mxu0
      %v666 = vadd.f32 %v252, %v665
      %667 = vmatprep.mubr.bf16.mxu0 %v364
      %668 = vmatmul.mubr.bf16.gmra.mrb[0].mxu0 %v363
      %v669 = vpop.f32.mrb[0].mxu0
      %v670 = vadd.f32 %v248, %v669
      %v671 = vpop.f32.mrb[0].mxu0
      %v672 = vadd.f32 %v252, %v671
      %v673 = vpop.f32.mrb[0].mxu0
      %v674 = vadd.f32 %v248, %v673
      %v675 = vpop.f32.mrb[0].mxu0
      %v676 = vadd.f32 %v252, %v675
      %677 = vmatprep.mubr.bf16.mxu0 %v366
      %678 = vmatmul.mubr.bf16.gmra.mrb[0].mxu0 %v365
      %v679 = vpop.f32.mrb[0].mxu0
      %v680 = vadd.f32 %v248, %v679
      %v681 = vpop.f32.mrb[0].mxu0
      %v682 = vadd.f32 %v252, %v681
      %v683 = vpop.f32.mrb[0].mxu0
      %v684 = vadd.f32 %v248, %v683
      %v685 = vpop.f32.mrb[0].mxu0
      %v686 = vadd.f32 %v252, %v685
      %687 = vmatprep.mubr.bf16.mxu0 %v368
      %688 = vmatmul.mubr.bf16.gmra.mrb[0].mxu0 %v367
      %v689 = vpop.f32.mrb[0].mxu0
      %v690 = vadd.f32 %v248, %v689
      %v691 = vpop.f32.mrb[0].mxu0
      %v692 = vadd.f32 %v252, %v691
      %v693 = vpop.f32.mrb[0].mxu0
      %v694 = vadd.f32 %v248, %v693
      %v695 = vpop.f32.mrb[0].mxu0
      %v696 = vadd.f32 %v252, %v695
      %697 = vmatprep.mubr.bf16.mxu0 %v370
      %698 = vmatmul.mubr.bf16.gmra.mrb[0].mxu0 %v369
      %v699 = vpop.f32.mrb[0].mxu0
      %v700 = vadd.f32 %v248, %v699
      %v701 = vpop.f32.mrb[0].mxu0
      %v702 = vadd.f32 %v252, %v701
      %v703 = vpop.f32.mrb[0].mxu0
      %v704 = vadd.f32 %v248, %v703
      %v705 = vpop.f32.mrb[0].mxu0
      %v706 = vadd.f32 %v252, %v705
      %707 = vmatprep.mubr.bf16.mxu0 %v372
      %708 = vmatmul.mubr.bf16.gmra.mrb[0].mxu0 %v371
      %v709 = vpop.f32.mrb[0].mxu0
      %v710 = vadd.f32 %v248, %v709
      %v711 = vpop.f32.mrb[0].mxu0
      %v712 = vadd.f32 %v252, %v711
      %v713 = vpop.f32.mrb[0].mxu0
      %v714 = vadd.f32 %v248, %v713
      %v715 = vpop.f32.mrb[0].mxu0
      %v716 = vadd.f32 %v252, %v715
      %717 = vmatprep.mubr.bf16.mxu0 %v374
      %718 = vmatmul.mubr.bf16.gmra.mrb[0].mxu0 %v373
      %v719 = vpop.f32.mrb[0].mxu0
      %v720 = vadd.f32 %v248, %v719
      %v721 = vpop.f32.mrb[0].mxu0
      %v722 = vadd.f32 %v252, %v721
      %v723 = vpop.f32.mrb[0].mxu0
      %v724 = vadd.f32 %v248, %v723
      %v725 = vpop.f32.mrb[0].mxu0
      %v726 = vadd.f32 %v252, %v725
      %727 = vmatprep.mubr.bf16.mxu0 %v376
      %728 = vmatmul.mubr.bf16.gmra.mrb[0].mxu0 %v375
      %v729 = vpop.f32.mrb[0].mxu0
      %v730 = vadd.f32 %v248, %v729
      %v731 = vpop.f32.mrb[0].mxu0
      %v732 = vadd.f32 %v252, %v731
      %v733 = vpop.f32.mrb[0].mxu0
      %v734 = vadd.f32 %v248, %v733
      %v735 = vpop.f32.mrb[0].mxu0
      %v736 = vadd.f32 %v252, %v735
      %737 = vmatprep.mubr.bf16.mxu0 %v378
      %738 = vmatmul.mubr.bf16.gmra.mrb[0].mxu0 %v377
      %v739 = vpop.f32.mrb[0].mxu0
      %v740 = vadd.f32 %v248, %v739
      %v741 = vpop.f32.mrb[0].mxu0
      %v742 = vadd.f32 %v252, %v741
      %v743 = vpop.f32.mrb[0].mxu0
      %v744 = vadd.f32 %v248, %v743
      %v745 = vpop.f32.mrb[0].mxu0
      %v746 = vadd.f32 %v252, %v745
      %747 = vmatprep.mubr.bf16.mxu0 %v380
      %748 = vmatmul.mubr.bf16.gmra.mrb[0].mxu0 %v379
      %v749 = vpop.f32.mrb[0].mxu0
      %v750 = vadd.f32 %v248, %v749
      %v751 = vpop.f32.mrb[0].mxu0
      %v752 = vadd.f32 %v252, %v751
      %v753 = vpop.f32.mrb[0].mxu0
      %v754 = vadd.f32 %v248, %v753
      %v755 = vpop.f32.mrb[0].mxu0
      %v756 = vadd.f32 %v252, %v755
      %757 = vmatprep.mubr.bf16.mxu0 %v382
      %758 = vmatmul.mubr.bf16.gmra.mrb[0].mxu0 %v381
      %v759 = vpop.f32.mrb[0].mxu0
      %v760 = vadd.f32 %v248, %v759
      %v761 = vpop.f32.mrb[0].mxu0
      %v762 = vadd.f32 %v252, %v761
      %v763 = vpop.f32.mrb[0].mxu0
      %v764 = vadd.f32 %v248, %v763
      %v765 = vpop.f32.mrb[0].mxu0
      %v766 = vadd.f32 %v252, %v765
      %767 = vdwg.mxu0
      %v768 = vpack.c.bf16 %v614, %v610
      %v769 = vpack.c.bf16 %v616, %v612
      %v770 = vpack.c.bf16 %v624, %v620
      %v771 = vpack.c.bf16 %v626, %v622
      %v772 = vpack.c.bf16 %v634, %v630
      %v773 = vpack.c.bf16 %v636, %v632
      %v774 = vpack.c.bf16 %v644, %v640
      %v775 = vpack.c.bf16 %v646, %v642
      %v776 = vpack.c.bf16 %v654, %v650
      %v777 = vpack.c.bf16 %v656, %v652
      %v778 = vpack.c.bf16 %v664, %v660
      %v779 = vpack.c.bf16 %v666, %v662
      %v780 = vpack.c.bf16 %v674, %v670
      %v781 = vpack.c.bf16 %v676, %v672
      %v782 = vpack.c.bf16 %v684, %v680
      %v783 = vpack.c.bf16 %v686, %v682
      %v784 = vpack.c.bf16 %v694, %v690
      %v785 = vpack.c.bf16 %v696, %v692
      %v786 = vpack.c.bf16 %v704, %v700
      %v787 = vpack.c.bf16 %v706, %v702
      %v788 = vpack.c.bf16 %v714, %v710
      %v789 = vpack.c.bf16 %v716, %v712
      %v790 = vpack.c.bf16 %v724, %v720
      %v791 = vpack.c.bf16 %v726, %v722
      %v792 = vpack.c.bf16 %v734, %v730
      %v793 = vpack.c.bf16 %v736, %v732
      %v794 = vpack.c.bf16 %v744, %v740
      %v795 = vpack.c.bf16 %v746, %v742
      %v796 = vpack.c.bf16 %v754, %v750
      %v797 = vpack.c.bf16 %v756, %v752
      %v798 = vpack.c.bf16 %v764, %v760
      %v799 = vpack.c.bf16 %v766, %v762
      %v832 = vunpack.c.l.b16 %v768
      %v833 = vunpack.c.l.b16 %v769
      %v834 = vunpack.c.h.b16 %v768
      %v835 = vunpack.c.h.b16 %v769
      %v836 = vunpack.c.l.b16 %v770
      %v837 = vunpack.c.l.b16 %v771
      %v838 = vunpack.c.h.b16 %v770
      %v839 = vunpack.c.h.b16 %v771
      %v840 = vunpack.c.l.b16 %v772
      %v841 = vunpack.c.l.b16 %v773
      %v842 = vunpack.c.h.b16 %v772
      %v843 = vunpack.c.h.b16 %v773
      %v844 = vunpack.c.l.b16 %v774
      %v845 = vunpack.c.l.b16 %v775
      %v846 = vunpack.c.h.b16 %v774
      %v847 = vunpack.c.h.b16 %v775
      %v848 = vunpack.c.l.b16 %v776
      %v849 = vunpack.c.l.b16 %v777
      %v850 = vunpack.c.h.b16 %v776
      %v851 = vunpack.c.h.b16 %v777
      %v852 = vunpack.c.l.b16 %v778
      %v853 = vunpack.c.l.b16 %v779
      %v854 = vunpack.c.h.b16 %v778
      %v855 = vunpack.c.h.b16 %v779
      %v856 = vunpack.c.l.b16 %v780
      %v857 = vunpack.c.l.b16 %v781
      %v858 = vunpack.c.h.b16 %v780
      %v859 = vunpack.c.h.b16 %v781
      %v860 = vunpack.c.l.b16 %v782
      %v861 = vunpack.c.l.b16 %v783
      %v862 = vunpack.c.h.b16 %v782
      %v863 = vunpack.c.h.b16 %v783
      %v864 = vunpack.c.l.b16 %v784
      %v865 = vunpack.c.l.b16 %v785
      %v866 = vunpack.c.h.b16 %v784
      %v867 = vunpack.c.h.b16 %v785
      %v868 = vunpack.c.l.b16 %v786
      %v869 = vunpack.c.l.b16 %v787
      %v870 = vunpack.c.h.b16 %v786
      %v871 = vunpack.c.h.b16 %v787
      %v872 = vunpack.c.l.b16 %v788
      %v873 = vunpack.c.l.b16 %v789
      %v874 = vunpack.c.h.b16 %v788
      %v875 = vunpack.c.h.b16 %v789
      %v876 = vunpack.c.l.b16 %v790
      %v877 = vunpack.c.l.b16 %v791
      %v878 = vunpack.c.h.b16 %v790
      %v879 = vunpack.c.h.b16 %v791
      %v880 = vunpack.c.l.b16 %v792
      %v881 = vunpack.c.l.b16 %v793
      %v882 = vunpack.c.h.b16 %v792
      %v883 = vunpack.c.h.b16 %v793
      %v884 = vunpack.c.l.b16 %v794
      %v885 = vunpack.c.l.b16 %v795
      %v886 = vunpack.c.h.b16 %v794
      %v887 = vunpack.c.h.b16 %v795
      %v888 = vunpack.c.l.b16 %v796
      %v889 = vunpack.c.l.b16 %v797
      %v890 = vunpack.c.h.b16 %v796
      %v891 = vunpack.c.h.b16 %v797
      %v892 = vunpack.c.l.b16 %v798
      %v893 = vunpack.c.l.b16 %v799
      %v894 = vunpack.c.h.b16 %v798
      %v895 = vunpack.c.h.b16 %v799
      %v896 = vpack.c.b16 %v833, %v832
      %v897 = vpack.c.b16 %v835, %v834
      %v898 = vpack.c.b16 %v837, %v836
      %v899 = vpack.c.b16 %v839, %v838
      %v900 = vpack.c.b16 %v841, %v840
      %v901 = vpack.c.b16 %v843, %v842
      %v902 = vpack.c.b16 %v845, %v844
      %v903 = vpack.c.b16 %v847, %v846
      %v904 = vpack.c.b16 %v849, %v848
      %v905 = vpack.c.b16 %v851, %v850
      %v906 = vpack.c.b16 %v853, %v852
      %v907 = vpack.c.b16 %v855, %v854
      %v908 = vpack.c.b16 %v857, %v856
      %v909 = vpack.c.b16 %v859, %v858
      %v910 = vpack.c.b16 %v861, %v860
      %v911 = vpack.c.b16 %v863, %v862
      %v912 = vpack.c.b16 %v865, %v864
      %v913 = vpack.c.b16 %v867, %v866
      %v914 = vpack.c.b16 %v869, %v868
      %v915 = vpack.c.b16 %v871, %v870
      %v916 = vpack.c.b16 %v873, %v872
      %v917 = vpack.c.b16 %v875, %v874
      %v918 = vpack.c.b16 %v877, %v876
      %v919 = vpack.c.b16 %v879, %v878
      %v920 = vpack.c.b16 %v881, %v880
      %v921 = vpack.c.b16 %v883, %v882
      %v922 = vpack.c.b16 %v885, %v884
      %v923 = vpack.c.b16 %v887, %v886
      %v924 = vpack.c.b16 %v889, %v888
      %v925 = vpack.c.b16 %v891, %v890
      %v926 = vpack.c.b16 %v893, %v892
      %v927 = vpack.c.b16 %v895, %v894
      %960 = vst [vmem:[%s177] sm:$0xff] %v896
      %961 = vst [vmem:[%s177 + $0x8] sm:$0xff] %v897
      %962 = vst [vmem:[%s177 + $0x10] sm:$0xff] %v898
      %963 = vst [vmem:[%s177 + $0x18] sm:$0xff] %v899
      %964 = vst [vmem:[%s177 + $0x20] sm:$0xff] %v900
      %965 = vst [vmem:[%s177 + $0x28] sm:$0xff] %v901
      %966 = vst [vmem:[%s177 + $0x30] sm:$0xff] %v902
      %967 = vst [vmem:[%s177 + $0x38] sm:$0xff] %v903
      %968 = vst [vmem:[%s177 + $0x40] sm:$0xff] %v904
      %969 = vst [vmem:[%s177 + $0x48] sm:$0xff] %v905
      %970 = vst [vmem:[%s177 + $0x50] sm:$0xff] %v906
      %971 = vst [vmem:[%s177 + $0x58] sm:$0xff] %v907
      %972 = vst [vmem:[%s177 + $0x60] sm:$0xff] %v908
      %973 = vst [vmem:[%s177 + $0x68] sm:$0xff] %v909
      %974 = vst [vmem:[%s177 + $0x70] sm:$0xff] %v910
      %975 = vst [vmem:[%s177 + $0x78] sm:$0xff] %v911
      %976 = vst [vmem:[%s177 + $0x80] sm:$0xff] %v912
      %977 = vst [vmem:[%s177 + $0x88] sm:$0xff] %v913
      %978 = vst [vmem:[%s177 + $0x90] sm:$0xff] %v914
      %979 = vst [vmem:[%s177 + $0x98] sm:$0xff] %v915
      %980 = vst [vmem:[%s177 + $0xa0] sm:$0xff] %v916
      %981 = vst [vmem:[%s177 + $0xa8] sm:$0xff] %v917
      %982 = vst [vmem:[%s177 + $0xb0] sm:$0xff] %v918
      %983 = vst [vmem:[%s177 + $0xb8] sm:$0xff] %v919
      %984 = vst [vmem:[%s177 + $0xc0] sm:$0xff] %v920
      %985 = vst [vmem:[%s177 + $0xc8] sm:$0xff] %v921
      %986 = vst [vmem:[%s177 + $0xd0] sm:$0xff] %v922
      %987 = vst [vmem:[%s177 + $0xd8] sm:$0xff] %v923
      %988 = vst [vmem:[%s177 + $0xe0] sm:$0xff] %v924
      %989 = vst [vmem:[%s177 + $0xe8] sm:$0xff] %v925
      %990 = vst [vmem:[%s177 + $0xf0] sm:$0xff] %v926
      %991 = vst [vmem:[%s177 + $0xf8] sm:$0xff] %v927
      %s992 = smul.u32 32, %s14
      %p993 = scmp.lt.s32.totalorder %s992, 63
      %s994 = scalar_select %p993, %s992, 63
      %s995 = smul.addr %s994, 2
      %s996 = smul.addr %s995, 4
      %s997 = scalar_lea.vmem %s3, %s996
      // Predicated region
      $region33: #{attention_forward.4} parent=31 // pred_check
        %p998 = pneg %p100
      $region34: #{attention_forward.4} parent=31 // pred_check_branch
        %1000 = sbr.rel (%p998) target = $region36
      $region35: #{attention_forward.4} parent=31 // pred_region
        %s1001 = smul.u32 32, %s14
      $region36: #{attention_forward.4} parent=31 // pred_fallthru
        _
    $region32: #{attention_forward.4} parent=5 // pred_fallthru
      _
    %p1002 = scmp.le.s32.totalorder 2, %s9
    // Predicated region
    $region37: #{attention_forward.4} parent=5 // pred_check
      %p1003 = pneg %p1002
    $region38: #{attention_forward.4} parent=5 // pred_check_branch
      %1005 = sbr.rel (%p1003) target = $region40
    $region39: #{attention_forward.4} parent=5 // pred_region
      %s1006 = ssub.s32 %s9, 2
      // Predicated region
      $region41: #{attention_forward.4} parent=39 // pred_check
        %p1007 = pneg %p106
      $region42: #{attention_forward.4} parent=39 // pred_check_branch
        %1009 = sbr.rel (%p1007) target = $region44
      $region43: #{attention_forward.4} parent=39 // pred_region
        %s1010 = smul.u32 32, %s15
        %p1011 = scmp.lt.s32.totalorder %s1010, 63
        %s1012 = scalar_select %p1011, %s1010, 63
        %s1013 = smul.addr %s1012, 2
        %s1014 = smul.addr %s1013, 4
        %s1015 = scalar_lea.vmem %s3, %s1014
      $region44: #{attention_forward.4} parent=39 // pred_fallthru
        _
    $region40: #{attention_forward.4} parent=5 // pred_fallthru
      _
  $region6: #{attention_forward.4} parent=0 // loop_footer
    %s13 = sadd.s32 1, %s9
  $region7: #{attention_forward.4} parent=0 // loop_footer_branch
    %8 = sbr.rel target = $region3
  $region8: #{attention_forward.4} parent=0 // loop_exit
    _

// kernel: attention_forward.6
$region0: #{attention_forward.6}
  #allocation0 [shape = 'u32[]', space=smem, size = 0x4, offset = 0x4, fixed_abs, tag = 'smem constant byte address 0x4 - core index']
  #allocation1 [shape = 'u32[144,128]{1,0:T(1,128)}', space=vmem, size = 0x12000, scoped, tag = 'internal scratch']
  %s0 = inlined_call_operand.vmem [shape: bf16[4,128,256], index: 0, kind: input, shape index: {}]
  %s1 = inlined_call_operand.vmem [shape: bf16[4,128,256], index: 1, kind: input, shape index: {}]
  %s2 = inlined_call_operand.vmem [shape: bf16[4,128,256], index: 2, kind: output, shape index: {0}]
  %s3 = inlined_call_operand.hbm [shape: f32[2,4,128,128], index: 3, kind: output, shape index: {1}]
  %4 = xla_tuple %s2, %s3
  %s5 = sld [smem:[#allocation0]]
  $region168: #{attention_forward.6} parent=0
    _
  %s7 = ssub.s32 1, %s5
  %s8 = scalar_select 0, %s7, %s5
  $region1: #{attention_forward.6} parent=0
    #allocation2 [shape = 'u8[65536]{0}', space=vmem, size = 0x10000, scoped, tag = 'input window, operand 0']
    #allocation3 [shape = 'u8[65536]{0}', space=vmem, size = 0x10000, scoped, tag = 'input window, operand 1']
    #allocation4 [shape = 'u8[65536]{0}', space=vmem, size = 0x10000, scoped, tag = 'output window, operand 0']
    #allocation5 [shape = 'u8[131072]{0}', space=vmem, size = 0x20000, scoped, tag = 'output window, operand 1']
    #allocation6 [shape = 's32[2]{0}', space=sflag, size = 0x8, scoped, tag = 'scoped memory for attention_forward.6']
    %9 = vsyncpa [#allocation6], 0
    %s10 = scalar_lea.sflag [#allocation6], 1
    %11 = vsyncpa %s10, 0
    loop: start=0, step=1, limit=10
    $region2: #{attention_forward.6} parent=1 // loop_pre_header
      _
    $region3: #{attention_forward.6} parent=1 // loop_header
      %s13 = sphi 0, %s17
      %p14 = scmp.ge.s32.totalorder %s13, 10
      %s20 = sphi 0, %s32
      %s21 = sphi 0, %s28
      %s22 = sphi 0, %s20
      %s23 = sphi 0, %s21
      %s24 = sphi 0, %s22
      %s25 = sphi 0, %s23
      %s37 = sphi 0, %s39
      %s40 = sphi 0, %s37
      %s41 = sphi 0, %s40
      %s57 = sphi 0, %s41
      %s65 = sphi 0, %s67
      %s68 = sphi 0, %s65
      %s69 = sphi 0, %s68
      %s85 = sphi 0, %s69
      %s93 = sphi 0, %s95
      %s96 = sphi 0, %s93
      %s97 = sphi 0, %s96
      %s113 = sphi 0, %s97
      %s121 = sphi 0, %s123
      %s124 = sphi 0, %s121
      %s125 = sphi 0, %s124
      %s141 = sphi 0, %s125
    $region4: #{attention_forward.6} parent=1 // loop_header_branch
      %16 = sbr.rel (%p14) target = $region8
    $region5: #{attention_forward.6} parent=1 // loop_body
      %s18 = ssub.s32 %s13, 1
      %s19 = ssub.s32 %s13, 2
      %s26 = sadd.s32 1, %s21
      %p27 = scmp.ge.s32.totalorder %s26, 4
      %s28 = scalar_select %p27, 0, %s26
      %s29 = sadd.s32 1, %s20
      %s30 = scalar_select %p27, %s29, %s20
      %p31 = scmp.ge.s32.totalorder %s30, 2
      %s32 = scalar_select %p31, 0, %s30
      %s33 = ssub.s32 %s21, %s28
      %s34 = ssub.s32 %s20, %s32
      %s35 = sor.u32 %s33, %s34
      %p36 = scmp.eq.s32.totalorder %s35, 0
      %s38 = sadd.s32 %s37, 1
      %s39 = scalar_select %p36, %s37, %s38
      %p42 = pneg %p36
      %p43 = scmp.eq.s32.totalorder %s13, 7
      %p44 = por %p42, %p43
      %p45 = scmp.ne.s32.totalorder %s37, %s40
      %p46 = scmp.eq.s32.totalorder %s13, 0
      %p47 = por %p45, %p46
      %p48 = scmp.ne.s32.totalorder %s37, %s40
      %p49 = scmp.eq.s32.totalorder %s18, 7
      %p50 = por %p48, %p49
      %p51 = scmp.ne.s32.totalorder %s40, %s41
      %p52 = scmp.eq.s32.totalorder %s18, 0
      %p53 = por %p51, %p52
      %p54 = scmp.ne.s32.totalorder %s40, %s41
      %p55 = scmp.eq.s32.totalorder %s19, 7
      %p56 = por %p54, %p55
      %p58 = scmp.ne.s32.totalorder %s41, %s57
      %p59 = scmp.eq.s32.totalorder %s19, 0
      %p60 = por %p58, %p59
      %s61 = ssub.s32 %s21, %s28
      %s62 = ssub.s32 %s20, %s32
      %s63 = sor.u32 %s61, %s62
      %p64 = scmp.eq.s32.totalorder %s63, 0
      %s66 = sadd.s32 %s65, 1
      %s67 = scalar_select %p64, %s65, %s66
      %p70 = pneg %p64
      %p71 = scmp.eq.s32.totalorder %s13, 7
      %p72 = por %p70, %p71
      %p73 = scmp.ne.s32.totalorder %s65, %s68
      %p74 = scmp.eq.s32.totalorder %s13, 0
      %p75 = por %p73, %p74
      %p76 = scmp.ne.s32.totalorder %s65, %s68
      %p77 = scmp.eq.s32.totalorder %s18, 7
      %p78 = por %p76, %p77
      %p79 = scmp.ne.s32.totalorder %s68, %s69
      %p80 = scmp.eq.s32.totalorder %s18, 0
      %p81 = por %p79, %p80
      %p82 = scmp.ne.s32.totalorder %s68, %s69
      %p83 = scmp.eq.s32.totalorder %s19, 7
      %p84 = por %p82, %p83
      %p86 = scmp.ne.s32.totalorder %s69, %s85
      %p87 = scmp.eq.s32.totalorder %s19, 0
      %p88 = por %p86, %p87
      %s89 = ssub.s32 %s21, %s28
      %s90 = ssub.s32 %s20, %s32
      %s91 = sor.u32 %s89, %s90
      %p92 = scmp.eq.s32.totalorder %s91, 0
      %s94 = sadd.s32 %s93, 1
      %s95 = scalar_select %p92, %s93, %s94
      %p98 = pneg %p92
      %p99 = scmp.eq.s32.totalorder %s13, 7
      %p100 = por %p98, %p99
      %p101 = scmp.ne.s32.totalorder %s93, %s96
      %p102 = scmp.eq.s32.totalorder %s13, 0
      %p103 = por %p101, %p102
      %p104 = scmp.ne.s32.totalorder %s93, %s96
      %p105 = scmp.eq.s32.totalorder %s18, 7
      %p106 = por %p104, %p105
      %p107 = scmp.ne.s32.totalorder %s96, %s97
      %p108 = scmp.eq.s32.totalorder %s18, 0
      %p109 = por %p107, %p108
      %p110 = scmp.ne.s32.totalorder %s96, %s97
      %p111 = scmp.eq.s32.totalorder %s19, 7
      %p112 = por %p110, %p111
      %p114 = scmp.ne.s32.totalorder %s97, %s113
      %p115 = scmp.eq.s32.totalorder %s19, 0
      %p116 = por %p114, %p115
      %s117 = ssub.s32 %s20, %s32
      %s118 = ssub.s32 %s21, %s28
      %s119 = sor.u32 %s117, %s118
      %p120 = scmp.eq.s32.totalorder %s119, 0
      %s122 = sadd.s32 %s121, 1
      %s123 = scalar_select %p120, %s121, %s122
      %p126 = pneg %p120
      %p127 = scmp.eq.s32.totalorder %s13, 7
      %p128 = por %p126, %p127
      %p129 = scmp.ne.s32.totalorder %s121, %s124
      %p130 = scmp.eq.s32.totalorder %s13, 0
      %p131 = por %p129, %p130
      %p132 = scmp.ne.s32.totalorder %s121, %s124
      %p133 = scmp.eq.s32.totalorder %s18, 7
      %p134 = por %p132, %p133
      %p135 = scmp.ne.s32.totalorder %s124, %s125
      %p136 = scmp.eq.s32.totalorder %s18, 0
      %p137 = por %p135, %p136
      %p138 = scmp.ne.s32.totalorder %s124, %s125
      %p139 = scmp.eq.s32.totalorder %s19, 7
      %p140 = por %p138, %p139
      %p142 = scmp.ne.s32.totalorder %s125, %s141
      %p143 = scmp.eq.s32.totalorder %s19, 0
      %p144 = por %p142, %p143
      %p145 = scmp.le.s32.totalorder 1, %s13
      %p146 = scmp.lt.s32.totalorder %s13, 9
      %p147 = pnand %p145, %p146
      %p148 = pneg %p147
      // Predicated region
      $region9: #{attention_forward.6} parent=5 // pred_check
        _
      $region10: #{attention_forward.6} parent=5 // pred_check_branch
        %150 = sbr.rel (%p147) target = $region12
      $region11: #{attention_forward.6} parent=5 // pred_region
        %s151 = ssub.s32 %s13, 1
      $region12: #{attention_forward.6} parent=5 // pred_fallthru
        _
      %p152 = scmp.lt.s32.totalorder %s13, 8
      // Predicated region
      $region13: #{attention_forward.6} parent=5 // pred_check
        %p153 = pneg %p152
      $region14: #{attention_forward.6} parent=5 // pred_check_branch
        %155 = sbr.rel (%p153) target = $region16
      $region15: #{attention_forward.6} parent=5 // pred_region
        // Predicated region
        $region17: #{attention_forward.6} parent=15 // pred_check
          %p156 = pneg %p47
        $region18: #{attention_forward.6} parent=15 // pred_check_branch
          %158 = sbr.rel (%p156) target = $region20
        $region19: #{attention_forward.6} parent=15 // pred_region
          %s159 = sand.u32 %s37, 1
          %s160 = sand.u32 %s37, 1
          %s161 = smul.addr %s160, 64
          %s162 = scalar_lea.vmem [#allocation2], %s161
          %s163 = smul.addr %s21, 32
          %s164 = sadd.s32 %s20, %s163
          %s165 = smul.addr %s164, 4
          %s166 = scalar_lea.vmem %s0, %s165
          // Predicated region
          $region21: #{attention_forward.6} parent=19 // pred_check
            _
          $region22: #{attention_forward.6} parent=19 // pred_check_branch
            %168 = sbr.rel (0) target = $region24
          $region23: #{attention_forward.6} parent=19 // pred_region
            // Predicated region
            $region25: #{attention_forward.6} parent=23 // pred_check
              _
            $region26: #{attention_forward.6} parent=23 // pred_check_branch
              %170 = sbr.rel target = $region28
            $region27: #{attention_forward.6} parent=23 // pred_region
              // Predicated region
              $region40: #{attention_forward.6} parent=27 // pred_check
                _
              $region41: #{attention_forward.6} parent=27 // pred_check_branch
                %215 = sbr.rel (0) target = $region43
              $region42: #{attention_forward.6} parent=27 // pred_region
                loop: start=0, step=1, limit=1
                $region44: #{attention_forward.6} parent=42 // loop_pre_header
                  _
                $region45: #{attention_forward.6} parent=42 // loop_header
                  %s217 = sphi 0, %s221
                  %p218 = scmp.ge.s32.totalorder %s217, 1
                  %s222 = sphi %s166, %s166
                  %s223 = sphi %s162, %s162
                $region46: #{attention_forward.6} parent=42 // loop_header_branch
                  %220 = sbr.rel (%p218) target = $region50
                $region47: #{attention_forward.6} parent=42 // loop_body
                  _
                $region48: #{attention_forward.6} parent=42 // loop_footer
                  %s221 = sadd.s32 1, %s217
                $region49: #{attention_forward.6} parent=42 // loop_footer_branch
                  %216 = sbr.rel target = $region45
                $region50: #{attention_forward.6} parent=42 // loop_exit
                  _
                loop: start=0, step=1, limit=1
                $region51: #{attention_forward.6} parent=42 // loop_pre_header
                  _
                $region52: #{attention_forward.6} parent=42 // loop_header
                  %s226 = sphi 0, %s230
                  %p227 = scmp.ge.s32.totalorder %s226, 1
                  %s231 = sphi %s166, %s166
                  %s232 = sphi %s162, %s162
                $region53: #{attention_forward.6} parent=42 // loop_header_branch
                  %229 = sbr.rel (%p227) target = $region57
                $region54: #{attention_forward.6} parent=42 // loop_body
                  %v233 = vld [vmem:[%s231] sm:$0xf]
                  %234 = vst [vmem:[%s232] sm:$0xf] %v233
                  %v235 = vld [vmem:[%s231 + $0x8] sm:$0xf]
                  %236 = vst [vmem:[%s232 + $0x4] sm:$0xf] %v235
                  %v237 = vld [vmem:[%s231 + $0x10] sm:$0xf]
                  %238 = vst [vmem:[%s232 + $0x8] sm:$0xf] %v237
                  %v239 = vld [vmem:[%s231 + $0x18] sm:$0xf]
                  %240 = vst [vmem:[%s232 + $0xc] sm:$0xf] %v239
                  %v241 = vld [vmem:[%s231 + $0x20] sm:$0xf]
                  %242 = vst [vmem:[%s232 + $0x10] sm:$0xf] %v241
                  %v243 = vld [vmem:[%s231 + $0x28] sm:$0xf]
                  %244 = vst [vmem:[%s232 + $0x14] sm:$0xf] %v243
                  %v245 = vld [vmem:[%s231 + $0x30] sm:$0xf]
                  %246 = vst [vmem:[%s232 + $0x18] sm:$0xf] %v245
                  %v247 = vld [vmem:[%s231 + $0x38] sm:$0xf]
                  %248 = vst [vmem:[%s232 + $0x1c] sm:$0xf] %v247
                  %v249 = vld [vmem:[%s231 + $0x40] sm:$0xf]
                  %250 = vst [vmem:[%s232 + $0x20] sm:$0xf] %v249
                  %v251 = vld [vmem:[%s231 + $0x48] sm:$0xf]
                  %252 = vst [vmem:[%s232 + $0x24] sm:$0xf] %v251
                  %v253 = vld [vmem:[%s231 + $0x50] sm:$0xf]
                  %254 = vst [vmem:[%s232 + $0x28] sm:$0xf] %v253
                  %v255 = vld [vmem:[%s231 + $0x58] sm:$0xf]
                  %256 = vst [vmem:[%s232 + $0x2c] sm:$0xf] %v255
                  %v257 = vld [vmem:[%s231 + $0x60] sm:$0xf]
                  %258 = vst [vmem:[%s232 + $0x30] sm:$0xf] %v257
                  %v259 = vld [vmem:[%s231 + $0x68] sm:$0xf]
                  %260 = vst [vmem:[%s232 + $0x34] sm:$0xf] %v259
                  %v261 = vld [vmem:[%s231 + $0x70] sm:$0xf]
                  %262 = vst [vmem:[%s232 + $0x38] sm:$0xf] %v261
                  %v263 = vld [vmem:[%s231 + $0x78] sm:$0xf]
                  %264 = vst [vmem:[%s232 + $0x3c] sm:$0xf] %v263
                $region55: #{attention_forward.6} parent=42 // loop_footer
                  %s230 = sadd.s32 1, %s226
                $region56: #{attention_forward.6} parent=42 // loop_footer_branch
                  %225 = sbr.rel target = $region52
                $region57: #{attention_forward.6} parent=42 // loop_exit
                  _
              $region43: #{attention_forward.6} parent=27 // pred_fallthru
                _
            $region28: #{attention_forward.6} parent=23 // pred_fallthru
              _
            // Predicated region
            $region29: #{attention_forward.6} parent=23 // pred_check
              _
            $region30: #{attention_forward.6} parent=23 // pred_check_branch
              %172 = sbr.rel (0) target = $region32
            $region31: #{attention_forward.6} parent=23 // pred_region
              loop: start=0, step=1, limit=1
              $region33: #{attention_forward.6} parent=31 // loop_pre_header
                _
              $region34: #{attention_forward.6} parent=31 // loop_header
                %s175 = sphi 0, %s179
                %p176 = scmp.ge.s32.totalorder %s175, 1
                %s180 = sphi %s166, %s166
                %s181 = sphi %s162, %s162
              $region35: #{attention_forward.6} parent=31 // loop_header_branch
                %178 = sbr.rel (%p176) target = $region39
              $region36: #{attention_forward.6} parent=31 // loop_body
                %v182 = vld [vmem:[%s180] sm:$0xf]
                %183 = vst [vmem:[%s181] sm:$0xf] %v182
                %v184 = vld [vmem:[%s180 + $0x8] sm:$0xf]
                %185 = vst [vmem:[%s181 + $0x4] sm:$0xf] %v184
                %v186 = vld [vmem:[%s180 + $0x10] sm:$0xf]
                %187 = vst [vmem:[%s181 + $0x8] sm:$0xf] %v186
                %v188 = vld [vmem:[%s180 + $0x18] sm:$0xf]
                %189 = vst [vmem:[%s181 + $0xc] sm:$0xf] %v188
                %v190 = vld [vmem:[%s180 + $0x20] sm:$0xf]
                %191 = vst [vmem:[%s181 + $0x10] sm:$0xf] %v190
                %v192 = vld [vmem:[%s180 + $0x28] sm:$0xf]
                %193 = vst [vmem:[%s181 + $0x14] sm:$0xf] %v192
                %v194 = vld [vmem:[%s180 + $0x30] sm:$0xf]
                %195 = vst [vmem:[%s181 + $0x18] sm:$0xf] %v194
                %v196 = vld [vmem:[%s180 + $0x38] sm:$0xf]
                %197 = vst [vmem:[%s181 + $0x1c] sm:$0xf] %v196
                %v198 = vld [vmem:[%s180 + $0x40] sm:$0xf]
                %199 = vst [vmem:[%s181 + $0x20] sm:$0xf] %v198
                %v200 = vld [vmem:[%s180 + $0x48] sm:$0xf]
                %201 = vst [vmem:[%s181 + $0x24] sm:$0xf] %v200
                %v202 = vld [vmem:[%s180 + $0x50] sm:$0xf]
                %203 = vst [vmem:[%s181 + $0x28] sm:$0xf] %v202
                %v204 = vld [vmem:[%s180 + $0x58] sm:$0xf]
                %205 = vst [vmem:[%s181 + $0x2c] sm:$0xf] %v204
                %v206 = vld [vmem:[%s180 + $0x60] sm:$0xf]
                %207 = vst [vmem:[%s181 + $0x30] sm:$0xf] %v206
                %v208 = vld [vmem:[%s180 + $0x68] sm:$0xf]
                %209 = vst [vmem:[%s181 + $0x34] sm:$0xf] %v208
                %v210 = vld [vmem:[%s180 + $0x70] sm:$0xf]
                %211 = vst [vmem:[%s181 + $0x38] sm:$0xf] %v210
                %v212 = vld [vmem:[%s180 + $0x78] sm:$0xf]
                %213 = vst [vmem:[%s181 + $0x3c] sm:$0xf] %v212
              $region37: #{attention_forward.6} parent=31 // loop_footer
                %s179 = sadd.s32 1, %s175
              $region38: #{attention_forward.6} parent=31 // loop_footer_branch
                %174 = sbr.rel target = $region34
              $region39: #{attention_forward.6} parent=31 // loop_exit
                _
            $region32: #{attention_forward.6} parent=23 // pred_fallthru
              _
          $region24: #{attention_forward.6} parent=19 // pred_fallthru
            _
          %265 = vnop
        $region20: #{attention_forward.6} parent=15 // pred_fallthru
          _
        // Predicated region
        $region58: #{attention_forward.6} parent=15 // pred_check
          %p266 = pneg %p75
        $region59: #{attention_forward.6} parent=15 // pred_check_branch
          %268 = sbr.rel (%p266) target = $region61
        $region60: #{attention_forward.6} parent=15 // pred_region
          %s269 = sand.u32 %s65, 1
          %s270 = sand.u32 %s65, 1
          %s271 = smul.addr %s270, 64
          %s272 = scalar_lea.vmem [#allocation3], %s271
          %s273 = smul.addr %s21, 32
          %s274 = sadd.s32 %s20, %s273
          %s275 = smul.addr %s274, 4
          %s276 = scalar_lea.vmem %s1, %s275
          // Predicated region
          $region62: #{attention_forward.6} parent=60 // pred_check
            _
          $region63: #{attention_forward.6} parent=60 // pred_check_branch
            %278 = sbr.rel (0) target = $region65
          $region64: #{attention_forward.6} parent=60 // pred_region
            // Predicated region
            $region66: #{attention_forward.6} parent=64 // pred_check
              _
            $region67: #{attention_forward.6} parent=64 // pred_check_branch
              %280 = sbr.rel target = $region69
            $region68: #{attention_forward.6} parent=64 // pred_region
              // Predicated region
              $region81: #{attention_forward.6} parent=68 // pred_check
                _
              $region82: #{attention_forward.6} parent=68 // pred_check_branch
                %325 = sbr.rel (0) target = $region84
              $region83: #{attention_forward.6} parent=68 // pred_region
                loop: start=0, step=1, limit=1
                $region85: #{attention_forward.6} parent=83 // loop_pre_header
                  _
                $region86: #{attention_forward.6} parent=83 // loop_header
                  %s327 = sphi 0, %s331
                  %p328 = scmp.ge.s32.totalorder %s327, 1
                  %s332 = sphi %s276, %s276
                  %s333 = sphi %s272, %s272
                $region87: #{attention_forward.6} parent=83 // loop_header_branch
                  %330 = sbr.rel (%p328) target = $region91
                $region88: #{attention_forward.6} parent=83 // loop_body
                  _
                $region89: #{attention_forward.6} parent=83 // loop_footer
                  %s331 = sadd.s32 1, %s327
                $region90: #{attention_forward.6} parent=83 // loop_footer_branch
                  %326 = sbr.rel target = $region86
                $region91: #{attention_forward.6} parent=83 // loop_exit
                  _
                loop: start=0, step=1, limit=1
                $region92: #{attention_forward.6} parent=83 // loop_pre_header
                  _
                $region93: #{attention_forward.6} parent=83 // loop_header
                  %s336 = sphi 0, %s340
                  %p337 = scmp.ge.s32.totalorder %s336, 1
                  %s341 = sphi %s276, %s276
                  %s342 = sphi %s272, %s272
                $region94: #{attention_forward.6} parent=83 // loop_header_branch
                  %339 = sbr.rel (%p337) target = $region98
                $region95: #{attention_forward.6} parent=83 // loop_body
                  %v343 = vld [vmem:[%s341] sm:$0xf]
                  %344 = vst [vmem:[%s342] sm:$0xf] %v343
                  %v345 = vld [vmem:[%s341 + $0x8] sm:$0xf]
                  %346 = vst [vmem:[%s342 + $0x4] sm:$0xf] %v345
                  %v347 = vld [vmem:[%s341 + $0x10] sm:$0xf]
                  %348 = vst [vmem:[%s342 + $0x8] sm:$0xf] %v347
                  %v349 = vld [vmem:[%s341 + $0x18] sm:$0xf]
                  %350 = vst [vmem:[%s342 + $0xc] sm:$0xf] %v349
                  %v351 = vld [vmem:[%s341 + $0x20] sm:$0xf]
                  %352 = vst [vmem:[%s342 + $0x10] sm:$0xf] %v351
                  %v353 = vld [vmem:[%s341 + $0x28] sm:$0xf]
                  %354 = vst [vmem:[%s342 + $0x14] sm:$0xf] %v353
                  %v355 = vld [vmem:[%s341 + $0x30] sm:$0xf]
                  %356 = vst [vmem:[%s342 + $0x18] sm:$0xf] %v355
                  %v357 = vld [vmem:[%s341 + $0x38] sm:$0xf]
                  %358 = vst [vmem:[%s342 + $0x1c] sm:$0xf] %v357
                  %v359 = vld [vmem:[%s341 + $0x40] sm:$0xf]
                  %360 = vst [vmem:[%s342 + $0x20] sm:$0xf] %v359
                  %v361 = vld [vmem:[%s341 + $0x48] sm:$0xf]
                  %362 = vst [vmem:[%s342 + $0x24] sm:$0xf] %v361
                  %v363 = vld [vmem:[%s341 + $0x50] sm:$0xf]
                  %364 = vst [vmem:[%s342 + $0x28] sm:$0xf] %v363
                  %v365 = vld [vmem:[%s341 + $0x58] sm:$0xf]
                  %366 = vst [vmem:[%s342 + $0x2c] sm:$0xf] %v365
                  %v367 = vld [vmem:[%s341 + $0x60] sm:$0xf]
                  %368 = vst [vmem:[%s342 + $0x30] sm:$0xf] %v367
                  %v369 = vld [vmem:[%s341 + $0x68] sm:$0xf]
                  %370 = vst [vmem:[%s342 + $0x34] sm:$0xf] %v369
                  %v371 = vld [vmem:[%s341 + $0x70] sm:$0xf]
                  %372 = vst [vmem:[%s342 + $0x38] sm:$0xf] %v371
                  %v373 = vld [vmem:[%s341 + $0x78] sm:$0xf]
                  %374 = vst [vmem:[%s342 + $0x3c] sm:$0xf] %v373
                $region96: #{attention_forward.6} parent=83 // loop_footer
                  %s340 = sadd.s32 1, %s336
                $region97: #{attention_forward.6} parent=83 // loop_footer_branch
                  %335 = sbr.rel target = $region93
                $region98: #{attention_forward.6} parent=83 // loop_exit
                  _
              $region84: #{attention_forward.6} parent=68 // pred_fallthru
                _
            $region69: #{attention_forward.6} parent=64 // pred_fallthru
              _
            // Predicated region
            $region70: #{attention_forward.6} parent=64 // pred_check
              _
            $region71: #{attention_forward.6} parent=64 // pred_check_branch
              %282 = sbr.rel (0) target = $region73
            $region72: #{attention_forward.6} parent=64 // pred_region
              loop: start=0, step=1, limit=1
              $region74: #{attention_forward.6} parent=72 // loop_pre_header
                _
              $region75: #{attention_forward.6} parent=72 // loop_header
                %s285 = sphi 0, %s289
                %p286 = scmp.ge.s32.totalorder %s285, 1
                %s290 = sphi %s276, %s276
                %s291 = sphi %s272, %s272
              $region76: #{attention_forward.6} parent=72 // loop_header_branch
                %288 = sbr.rel (%p286) target = $region80
              $region77: #{attention_forward.6} parent=72 // loop_body
                %v292 = vld [vmem:[%s290] sm:$0xf]
                %293 = vst [vmem:[%s291] sm:$0xf] %v292
                %v294 = vld [vmem:[%s290 + $0x8] sm:$0xf]
                %295 = vst [vmem:[%s291 + $0x4] sm:$0xf] %v294
                %v296 = vld [vmem:[%s290 + $0x10] sm:$0xf]
                %297 = vst [vmem:[%s291 + $0x8] sm:$0xf] %v296
                %v298 = vld [vmem:[%s290 + $0x18] sm:$0xf]
                %299 = vst [vmem:[%s291 + $0xc] sm:$0xf] %v298
                %v300 = vld [vmem:[%s290 + $0x20] sm:$0xf]
                %301 = vst [vmem:[%s291 + $0x10] sm:$0xf] %v300
                %v302 = vld [vmem:[%s290 + $0x28] sm:$0xf]
                %303 = vst [vmem:[%s291 + $0x14] sm:$0xf] %v302
                %v304 = vld [vmem:[%s290 + $0x30] sm:$0xf]
                %305 = vst [vmem:[%s291 + $0x18] sm:$0xf] %v304
                %v306 = vld [vmem:[%s290 + $0x38] sm:$0xf]
                %307 = vst [vmem:[%s291 + $0x1c] sm:$0xf] %v306
                %v308 = vld [vmem:[%s290 + $0x40] sm:$0xf]
                %309 = vst [vmem:[%s291 + $0x20] sm:$0xf] %v308
                %v310 = vld [vmem:[%s290 + $0x48] sm:$0xf]
                %311 = vst [vmem:[%s291 + $0x24] sm:$0xf] %v310
                %v312 = vld [vmem:[%s290 + $0x50] sm:$0xf]
                %313 = vst [vmem:[%s291 + $0x28] sm:$0xf] %v312
                %v314 = vld [vmem:[%s290 + $0x58] sm:$0xf]
                %315 = vst [vmem:[%s291 + $0x2c] sm:$0xf] %v314
                %v316 = vld [vmem:[%s290 + $0x60] sm:$0xf]
                %317 = vst [vmem:[%s291 + $0x30] sm:$0xf] %v316
                %v318 = vld [vmem:[%s290 + $0x68] sm:$0xf]
                %319 = vst [vmem:[%s291 + $0x34] sm:$0xf] %v318
                %v320 = vld [vmem:[%s290 + $0x70] sm:$0xf]
                %321 = vst [vmem:[%s291 + $0x38] sm:$0xf] %v320
                %v322 = vld [vmem:[%s290 + $0x78] sm:$0xf]
                %323 = vst [vmem:[%s291 + $0x3c] sm:$0xf] %v322
              $region78: #{attention_forward.6} parent=72 // loop_footer
                %s289 = sadd.s32 1, %s285
              $region79: #{attention_forward.6} parent=72 // loop_footer_branch
                %284 = sbr.rel target = $region75
              $region80: #{attention_forward.6} parent=72 // loop_exit
                _
            $region73: #{attention_forward.6} parent=64 // pred_fallthru
              _
          $region65: #{attention_forward.6} parent=60 // pred_fallthru
            _
          %375 = vnop
        $region61: #{attention_forward.6} parent=15 // pred_fallthru
          _
      $region16: #{attention_forward.6} parent=5 // pred_fallthru
        _
      %p376 = scmp.le.s32.totalorder 1, %s13
      %p377 = scmp.lt.s32.totalorder %s13, 9
      %p378 = pnand %p376, %p377
      %p379 = pneg %p378
      // Predicated region
      $region99: #{attention_forward.6} parent=5 // pred_check
        _
      $region100: #{attention_forward.6} parent=5 // pred_check_branch
        %381 = sbr.rel (%p378) target = $region102
      $region101: #{attention_forward.6} parent=5 // pred_region
        %s382 = ssub.s32 %s13, 1
        %s383 = sand.u32 %s40, 1
        %s384 = sand.u32 %s40, 1
        %s385 = smul.addr %s384, 64
        %s386 = scalar_lea.vmem [#allocation2], %s385
        // Predicated region
        $region103: #{attention_forward.6} parent=101 // pred_check
          %p387 = pneg %p53
        $region104: #{attention_forward.6} parent=101 // pred_check_branch
          %389 = sbr.rel (%p387) target = $region106
        $region105: #{attention_forward.6} parent=101 // pred_region
          _
        $region106: #{attention_forward.6} parent=101 // pred_fallthru
          _
        %s390 = sand.u32 %s68, 1
        %s391 = sand.u32 %s68, 1
        %s392 = smul.addr %s391, 64
        %s393 = scalar_lea.vmem [#allocation3], %s392
        // Predicated region
        $region107: #{attention_forward.6} parent=101 // pred_check
          %p394 = pneg %p81
        $region108: #{attention_forward.6} parent=101 // pred_check_branch
          %396 = sbr.rel (%p394) target = $region110
        $region109: #{attention_forward.6} parent=101 // pred_region
          _
        $region110: #{attention_forward.6} parent=101 // pred_fallthru
          _
        %s397 = sand.u32 %s40, 1
        %s398 = sand.u32 %s40, 1
        %s399 = smul.addr %s398, 64
        %s400 = scalar_lea.vmem [#allocation2], %s399
        %p401 = pneg %p53
        %p402 = pneg %p50
        %s403 = sand.u32 %s68, 1
        %s404 = sand.u32 %s68, 1
        %s405 = smul.addr %s404, 64
        %s406 = scalar_lea.vmem [#allocation3], %s405
        %p407 = pneg %p81
        %p408 = pneg %p78
        %p409 = pneg %p109
        %p410 = pneg %p106
        %s411 = sand.u32 %s96, 1
        %s412 = sand.u32 %s96, 1
        %s413 = smul.addr %s412, 64
        %s414 = scalar_lea.vmem [#allocation4], %s413
        %p415 = pneg %p137
        %p416 = pneg %p134
        %s417 = sand.u32 %s124, 1
        %s418 = scalar_lea.sflag [#allocation6], %s417
        %s419 = sand.u32 %s124, 1
        %s420 = smul.addr %s419, 128
        %s421 = scalar_lea.vmem [#allocation5], %s420
        %v423 = vld [vmem:[%s386] sm:$0xf]
        %v424 = vld [vmem:[%s386 + $0x4] sm:$0xf]
        %v425 = vld [vmem:[%s386 + $0x8] sm:$0xf]
        %v426 = vld [vmem:[%s386 + $0xc] sm:$0xf]
        %v427 = vld [vmem:[%s386 + $0x10] sm:$0xf]
        %v428 = vld [vmem:[%s386 + $0x14] sm:$0xf]
        %v429 = vld [vmem:[%s386 + $0x18] sm:$0xf]
        %v430 = vld [vmem:[%s386 + $0x1c] sm:$0xf]
        %v431 = vld [vmem:[%s386 + $0x20] sm:$0xf]
        %v432 = vld [vmem:[%s386 + $0x24] sm:$0xf]
        %v433 = vld [vmem:[%s386 + $0x28] sm:$0xf]
        %v434 = vld [vmem:[%s386 + $0x2c] sm:$0xf]
        %v435 = vld [vmem:[%s386 + $0x30] sm:$0xf]
        %v436 = vld [vmem:[%s386 + $0x34] sm:$0xf]
        %v437 = vld [vmem:[%s386 + $0x38] sm:$0xf]
        %v438 = vld [vmem:[%s386 + $0x3c] sm:$0xf]
        %v439 = vld [vmem:[%s393] sm:$0xf]
        %v440 = vld [vmem:[%s393 + $0x4] sm:$0xf]
        %v441 = vld [vmem:[%s393 + $0x8] sm:$0xf]
        %v442 = vld [vmem:[%s393 + $0xc] sm:$0xf]
        %v443 = vld [vmem:[%s393 + $0x10] sm:$0xf]
        %v444 = vld [vmem:[%s393 + $0x14] sm:$0xf]
        %v445 = vld [vmem:[%s393 + $0x18] sm:$0xf]
        %v446 = vld [vmem:[%s393 + $0x1c] sm:$0xf]
        %v447 = vld [vmem:[%s393 + $0x20] sm:$0xf]
        %v448 = vld [vmem:[%s393 + $0x24] sm:$0xf]
        %v449 = vld [vmem:[%s393 + $0x28] sm:$0xf]
        %v450 = vld [vmem:[%s393 + $0x2c] sm:$0xf]
        %v451 = vld [vmem:[%s393 + $0x30] sm:$0xf]
        %v452 = vld [vmem:[%s393 + $0x34] sm:$0xf]
        %v453 = vld [vmem:[%s393 + $0x38] sm:$0xf]
        %v454 = vld [vmem:[%s393 + $0x3c] sm:$0xf]
        %v471 = vunpack.c.l.b16 %v439
        %v472 = vunpack.c.l.b16 %v440
        %v473 = vunpack.c.l.b16 %v441
        %v474 = vunpack.c.l.b16 %v442
        %v475 = vunpack.c.l.b16 %v443
        %v476 = vunpack.c.l.b16 %v444
        %v477 = vunpack.c.l.b16 %v445
        %v478 = vunpack.c.l.b16 %v446
        %v479 = vunpack.c.l.b16 %v447
        %v480 = vunpack.c.l.b16 %v448
        %v481 = vunpack.c.l.b16 %v449
        %v482 = vunpack.c.l.b16 %v450
        %v483 = vunpack.c.l.b16 %v451
        %v484 = vunpack.c.l.b16 %v452
        %v485 = vunpack.c.l.b16 %v453
        %v486 = vunpack.c.l.b16 %v454
        %v487 = vpack.c.b16 %v472, %v471
        %v488 = vpack.c.b16 %v474, %v473
        %v489 = vpack.c.b16 %v476, %v475
        %v490 = vpack.c.b16 %v478, %v477
        %v491 = vpack.c.b16 %v480, %v479
        %v492 = vpack.c.b16 %v482, %v481
        %v493 = vpack.c.b16 %v484, %v483
        %v494 = vpack.c.b16 %v486, %v485
        %v519 = vunpack.c.l.b16 %v423
        %v520 = vunpack.c.l.b16 %v424
        %v521 = vunpack.c.l.b16 %v425
        %v522 = vunpack.c.l.b16 %v426
        %v523 = vunpack.c.l.b16 %v427
        %v524 = vunpack.c.l.b16 %v428
        %v525 = vunpack.c.l.b16 %v429
        %v526 = vunpack.c.l.b16 %v430
        %v527 = vunpack.c.l.b16 %v431
        %v528 = vunpack.c.l.b16 %v432
        %v529 = vunpack.c.l.b16 %v433
        %v530 = vunpack.c.l.b16 %v434
        %v531 = vunpack.c.l.b16 %v435
        %v532 = vunpack.c.l.b16 %v436
        %v533 = vunpack.c.l.b16 %v437
        %v534 = vunpack.c.l.b16 %v438
        %v535 = vpack.c.b16 %v520, %v519
        %v536 = vpack.c.b16 %v522, %v521
        %v537 = vpack.c.b16 %v524, %v523
        %v538 = vpack.c.b16 %v526, %v525
        %v539 = vpack.c.b16 %v528, %v527
        %v540 = vpack.c.b16 %v530, %v529
        %v541 = vpack.c.b16 %v532, %v531
        %v542 = vpack.c.b16 %v534, %v533
        %551 = vmatprep.subr.bf16.mxu0 0
        %552 = vmatpush1.bf16.xpose.msra.mxu0 %v535
        %553 = vmatprep.subr.bf16.mxu0 0
        %554 = vmatpush1.bf16.xpose.msra.mxu0 %v536
        %555 = vmatprep.subr.bf16.mxu0 0
        %556 = vmatpush1.bf16.xpose.msra.mxu0 %v537
        %557 = vmatprep.subr.bf16.mxu0 0
        %558 = vmatpush1.bf16.xpose.msra.mxu0 %v538
        %559 = vmatprep.subr.bf16.mxu0 0
        %560 = vmatpush1.bf16.xpose.msra.mxu0 %v539
        %561 = vmatprep.subr.bf16.mxu0 0
        %562 = vmatpush1.bf16.xpose.msra.mxu0 %v540
        %563 = vmatprep.subr.bf16.mxu0 0
        %564 = vmatpush1.bf16.xpose.msra.mxu0 %v541
        %565 = vmatprep.subr.bf16.mxu0 0
        %566 = vmatpush1.bf16.xpose.msra.mxu0 %v542
        %567 = vmatprep.subr.bf16.mxu0 0
        %568 = vmatpush1.bf16.xpose.msra.mxu0 0
        %569 = vmatprep.subr.bf16.mxu0 0
        %570 = vmatpush1.bf16.xpose.msra.mxu0 0
        %571 = vmatprep.subr.bf16.mxu0 0
        %572 = vmatpush1.bf16.xpose.msra.mxu0 0
        %573 = vmatprep.subr.bf16.mxu0 0
        %574 = vmatpush1.bf16.xpose.msra.mxu0 0
        %575 = vmatprep.subr.bf16.mxu0 0
        %576 = vmatpush1.bf16.xpose.msra.mxu0 0
        %577 = vmatprep.subr.bf16.mxu0 0
        %578 = vmatpush1.bf16.xpose.msra.mxu0 0
        %579 = vmatprep.subr.bf16.mxu0 0
        %580 = vmatpush1.bf16.xpose.msra.mxu0 0
        %581 = vmatprep.subr.bf16.mxu0 0
        %582 = vmatpush1.bf16.xpose.msra.mxu0 0
        %583 = vmatprep.mubr.bf16.mxu0 0
        %584 = vmatmul.mubr.bf16.gmra.mrb[0].mxu0 %v487
        %v585 = vpop.f32.mrb[0].mxu0
        %v586 = vadd.f32 0.0, %v585
        %v587 = vpop.f32.mrb[0].mxu0
        %v588 = vpop.f32.mrb[0].mxu0
        %v589 = vadd.f32 0.0, %v588
        %v590 = vpop.f32.mrb[0].mxu0
        %591 = vmatprep.mubr.bf16.mxu0 0
        %592 = vmatmul.mubr.bf16.gmra.mrb[0].mxu0 %v488
        %v593 = vpop.f32.mrb[0].mxu0
        %v594 = vadd.f32 0.0, %v593
        %v595 = vpop.f32.mrb[0].mxu0
        %v596 = vpop.f32.mrb[0].mxu0
        %v597 = vadd.f32 0.0, %v596
        %v598 = vpop.f32.mrb[0].mxu0
        %599 = vmatprep.mubr.bf16.mxu0 0
        %600 = vmatmul.mubr.bf16.gmra.mrb[0].mxu0 %v489
        %v601 = vpop.f32.mrb[0].mxu0
        %v602 = vadd.f32 0.0, %v601
        %v603 = vpop.f32.mrb[0].mxu0
        %v604 = vpop.f32.mrb[0].mxu0
        %v605 = vadd.f32 0.0, %v604
        %v606 = vpop.f32.mrb[0].mxu0
        %607 = vmatprep.mubr.bf16.mxu0 0
        %608 = vmatmul.mubr.bf16.gmra.mrb[0].mxu0 %v490
        %v609 = vpop.f32.mrb[0].mxu0
        %v610 = vadd.f32 0.0, %v609
        %v611 = vpop.f32.mrb[0].mxu0
        %v612 = vpop.f32.mrb[0].mxu0
        %v613 = vadd.f32 0.0, %v612
        %v614 = vpop.f32.mrb[0].mxu0
        %615 = vmatprep.mubr.bf16.mxu0 0
        %616 = vmatmul.mubr.bf16.gmra.mrb[0].mxu0 %v491
        %v617 = vpop.f32.mrb[0].mxu0
        %v618 = vadd.f32 0.0, %v617
        %v619 = vpop.f32.mrb[0].mxu0
        %v620 = vpop.f32.mrb[0].mxu0
        %v621 = vadd.f32 0.0, %v620
        %v622 = vpop.f32.mrb[0].mxu0
        %623 = vmatprep.mubr.bf16.mxu0 0
        %624 = vmatmul.mubr.bf16.gmra.mrb[0].mxu0 %v492
        %v625 = vpop.f32.mrb[0].mxu0
        %v626 = vadd.f32 0.0, %v625
        %v627 = vpop.f32.mrb[0].mxu0
        %v628 = vpop.f32.mrb[0].mxu0
        %v629 = vadd.f32 0.0, %v628
        %v630 = vpop.f32.mrb[0].mxu0
        %631 = vmatprep.mubr.bf16.mxu0 0
        %632 = vmatmul.mubr.bf16.gmra.mrb[0].mxu0 %v493
        %v633 = vpop.f32.mrb[0].mxu0
        %v634 = vadd.f32 0.0, %v633
        %v635 = vpop.f32.mrb[0].mxu0
        %v636 = vpop.f32.mrb[0].mxu0
        %v637 = vadd.f32 0.0, %v636
        %v638 = vpop.f32.mrb[0].mxu0
        %639 = vmatprep.mubr.bf16.mxu0 0
        %640 = vmatmul.mubr.bf16.gmra.mrb[0].mxu0 %v494
        %v641 = vpop.f32.mrb[0].mxu0
        %v642 = vadd.f32 0.0, %v641
        %v643 = vpop.f32.mrb[0].mxu0
        %v644 = vpop.f32.mrb[0].mxu0
        %v645 = vadd.f32 0.0, %v644
        %v646 = vpop.f32.mrb[0].mxu0
        %647 = vdwg.mxu0
        %648 = vmax.xlane.f32.xlu0 %v586
        %v649 = vpop.xlane.xlu0 %648
        %650 = vmax.xlane.f32.xlu0 %v589
        %v651 = vpop.xlane.xlu0 %650
        %652 = vmax.xlane.f32.xlu0 %v594
        %v653 = vpop.xlane.xlu0 %652
        %654 = vmax.xlane.f32.xlu0 %v597
        %v655 = vpop.xlane.xlu0 %654
        %656 = vmax.xlane.f32.xlu0 %v602
        %v657 = vpop.xlane.xlu0 %656
        %658 = vmax.xlane.f32.xlu0 %v605
        %v659 = vpop.xlane.xlu0 %658
        %660 = vmax.xlane.f32.xlu0 %v610
        %v661 = vpop.xlane.xlu0 %660
        %662 = vmax.xlane.f32.xlu0 %v613
        %v663 = vpop.xlane.xlu0 %662
        %664 = vmax.xlane.f32.xlu0 %v618
        %v665 = vpop.xlane.xlu0 %664
        %666 = vmax.xlane.f32.xlu0 %v621
        %v667 = vpop.xlane.xlu0 %666
        %668 = vmax.xlane.f32.xlu0 %v626
        %v669 = vpop.xlane.xlu0 %668
        %670 = vmax.xlane.f32.xlu0 %v629
        %v671 = vpop.xlane.xlu0 %670
        %672 = vmax.xlane.f32.xlu0 %v634
        %v673 = vpop.xlane.xlu0 %672
        %674 = vmax.xlane.f32.xlu0 %v637
        %v675 = vpop.xlane.xlu0 %674
        %676 = vmax.xlane.f32.xlu0 %v642
        %v677 = vpop.xlane.xlu0 %676
        %678 = vmax.xlane.f32.xlu0 %v645
        %v679 = vpop.xlane.xlu0 %678
        %v680 = vsub.f32 %v586, %v649
        %v681 = vsub.f32 %v589, %v651
        %v682 = vsub.f32 %v594, %v653
        %v683 = vsub.f32 %v597, %v655
        %v684 = vsub.f32 %v602, %v657
        %v685 = vsub.f32 %v605, %v659
        %v686 = vsub.f32 %v610, %v661
        %v687 = vsub.f32 %v613, %v663
        %v688 = vsub.f32 %v618, %v665
        %v689 = vsub.f32 %v621, %v667
        %v690 = vsub.f32 %v626, %v669
        %v691 = vsub.f32 %v629, %v671
        %v692 = vsub.f32 %v634, %v673
        %v693 = vsub.f32 %v637, %v675
        %v694 = vsub.f32 %v642, %v677
        %v695 = vsub.f32 %v645, %v679
        %v696 = vmul.f32 %v680, 1.442695
        %v697 = vpow.pop %v696
        %v698 = vmul.f32 %v681, 1.442695
        %v699 = vpow.pop %v698
        %v700 = vmul.f32 %v682, 1.442695
        %v701 = vpow.pop %v700
        %v702 = vmul.f32 %v683, 1.442695
        %v703 = vpow.pop %v702
        %v704 = vmul.f32 %v684, 1.442695
        %v705 = vpow.pop %v704
        %v706 = vmul.f32 %v685, 1.442695
        %v707 = vpow.pop %v706
        %v708 = vmul.f32 %v686, 1.442695
        %v709 = vpow.pop %v708
        %v710 = vmul.f32 %v687, 1.442695
        %v711 = vpow.pop %v710
        %v712 = vmul.f32 %v688, 1.442695
        %v713 = vpow.pop %v712
        %v714 = vmul.f32 %v689, 1.442695
        %v715 = vpow.pop %v714
        %v716 = vmul.f32 %v690, 1.442695
        %v717 = vpow.pop %v716
        %v718 = vmul.f32 %v691, 1.442695
        %v719 = vpow.pop %v718
        %v720 = vmul.f32 %v692, 1.442695
        %v721 = vpow.pop %v720
        %v722 = vmul.f32 %v693, 1.442695
        %v723 = vpow.pop %v722
        %v724 = vmul.f32 %v694, 1.442695
        %v725 = vpow.pop %v724
        %v726 = vmul.f32 %v695, 1.442695
        %v727 = vpow.pop %v726
        %728 = vadd.xlane.f32.xlu0 %v697
        %v729 = vpop.xlane.xlu0 %728
        %730 = vadd.xlane.f32.xlu0 %v699
        %v731 = vpop.xlane.xlu0 %730
        %732 = vadd.xlane.f32.xlu0 %v701
        %v733 = vpop.xlane.xlu0 %732
        %734 = vadd.xlane.f32.xlu0 %v703
        %v735 = vpop.xlane.xlu0 %734
        %736 = vadd.xlane.f32.xlu0 %v705
        %v737 = vpop.xlane.xlu0 %736
        %738 = vadd.xlane.f32.xlu0 %v707
        %v739 = vpop.xlane.xlu0 %738
        %740 = vadd.xlane.f32.xlu0 %v709
        %v741 = vpop.xlane.xlu0 %740
        %742 = vadd.xlane.f32.xlu0 %v711
        %v743 = vpop.xlane.xlu0 %742
        %744 = vadd.xlane.f32.xlu0 %v713
        %v745 = vpop.xlane.xlu0 %744
        %746 = vadd.xlane.f32.xlu0 %v715
        %v747 = vpop.xlane.xlu0 %746
        %748 = vadd.xlane.f32.xlu0 %v717
        %v749 = vpop.xlane.xlu0 %748
        %750 = vadd.xlane.f32.xlu0 %v719
        %v751 = vpop.xlane.xlu0 %750
        %752 = vadd.xlane.f32.xlu0 %v721
        %v753 = vpop.xlane.xlu0 %752
        %754 = vadd.xlane.f32.xlu0 %v723
        %v755 = vpop.xlane.xlu0 %754
        %756 = vadd.xlane.f32.xlu0 %v725
        %v757 = vpop.xlane.xlu0 %756
        %758 = vadd.xlane.f32.xlu0 %v727
        %v759 = vpop.xlane.xlu0 %758
        %v760 = vrcp.pop %v729
        %v761 = vrcp.pop %v731
        %v762 = vrcp.pop %v733
        %v763 = vrcp.pop %v735
        %v764 = vrcp.pop %v737
        %v765 = vrcp.pop %v739
        %v766 = vrcp.pop %v741
        %v767 = vrcp.pop %v743
        %v768 = vrcp.pop %v745
        %v769 = vrcp.pop %v747
        %v770 = vrcp.pop %v749
        %v771 = vrcp.pop %v751
        %v772 = vrcp.pop %v753
        %v773 = vrcp.pop %v755
        %v774 = vrcp.pop %v757
        %v775 = vrcp.pop %v759
        %v776 = vmul.f32 %v697, %v760
        %v777 = vmul.f32 %v699, %v761
        %v778 = vmul.f32 %v701, %v762
        %v779 = vmul.f32 %v703, %v763
        %v780 = vmul.f32 %v705, %v764
        %v781 = vmul.f32 %v707, %v765
        %v782 = vmul.f32 %v709, %v766
        %v783 = vmul.f32 %v711, %v767
        %v784 = vmul.f32 %v713, %v768
        %v785 = vmul.f32 %v715, %v769
        %v786 = vmul.f32 %v717, %v770
        %v787 = vmul.f32 %v719, %v771
        %v788 = vmul.f32 %v721, %v772
        %v789 = vmul.f32 %v723, %v773
        %v790 = vmul.f32 %v725, %v774
        %v791 = vmul.f32 %v727, %v775
        %v792 = vpack.c.bf16 %v777, %v776
        %v793 = vpack.c.bf16 %v779, %v778
        %v794 = vpack.c.bf16 %v781, %v780
        %v795 = vpack.c.bf16 %v783, %v782
        %v796 = vpack.c.bf16 %v785, %v784
        %v797 = vpack.c.bf16 %v787, %v786
        %v798 = vpack.c.bf16 %v789, %v788
        %v799 = vpack.c.bf16 %v791, %v790
        %800 = vmatprep.subr.bf16.mxu0 0
        %801 = vmatpush1.bf16.msra.mxu0 %v535
        %802 = vmatprep.subr.bf16.mxu0 0
        %803 = vmatpush1.bf16.msra.mxu0 %v536
        %804 = vmatprep.subr.bf16.mxu0 0
        %805 = vmatpush1.bf16.msra.mxu0 %v537
        %806 = vmatprep.subr.bf16.mxu0 0
        %807 = vmatpush1.bf16.msra.mxu0 %v538
        %808 = vmatprep.subr.bf16.mxu0 0
        %809 = vmatpush1.bf16.msra.mxu0 %v539
        %810 = vmatprep.subr.bf16.mxu0 0
        %811 = vmatpush1.bf16.msra.mxu0 %v540
        %812 = vmatprep.subr.bf16.mxu0 0
        %813 = vmatpush1.bf16.msra.mxu0 %v541
        %814 = vmatprep.subr.bf16.mxu0 0
        %815 = vmatpush1.bf16.msra.mxu0 %v542
        %816 = vmatprep.subr.bf16.mxu0 0
        %817 = vmatpush1.bf16.msra.mxu0 0
        %818 = vmatprep.subr.bf16.mxu0 0
        %819 = vmatpush1.bf16.msra.mxu0 0
        %820 = vmatprep.subr.bf16.mxu0 0
        %821 = vmatpush1.bf16.msra.mxu0 0
        %822 = vmatprep.subr.bf16.mxu0 0
        %823 = vmatpush1.bf16.msra.mxu0 0
        %824 = vmatprep.subr.bf16.mxu0 0
        %825 = vmatpush1.bf16.msra.mxu0 0
        %826 = vmatprep.subr.bf16.mxu0 0
        %827 = vmatpush1.bf16.msra.mxu0 0
        %828 = vmatprep.subr.bf16.mxu0 0
        %829 = vmatpush1.bf16.msra.mxu0 0
        %830 = vmatprep.subr.bf16.mxu0 0
        %831 = vmatpush1.bf16.msra.mxu0 0
        %832 = vmatprep.mubr.bf16.mxu0 0
        %833 = vmatmul.mubr.bf16.gmra.mrb[0].mxu0 %v792
        %v834 = vpop.f32.mrb[0].mxu0
        %v835 = vadd.f32 0.0, %v834
        %v836 = vpop.f32.mrb[0].mxu0
        %v837 = vpop.f32.mrb[0].mxu0
        %v838 = vadd.f32 0.0, %v837
        %v839 = vpop.f32.mrb[0].mxu0
        %840 = vmatprep.mubr.bf16.mxu0 0
        %841 = vmatmul.mubr.bf16.gmra.mrb[0].mxu0 %v793
        %v842 = vpop.f32.mrb[0].mxu0
        %v843 = vadd.f32 0.0, %v842
        %v844 = vpop.f32.mrb[0].mxu0
        %v845 = vpop.f32.mrb[0].mxu0
        %v846 = vadd.f32 0.0, %v845
        %v847 = vpop.f32.mrb[0].mxu0
        %848 = vmatprep.mubr.bf16.mxu0 0
        %849 = vmatmul.mubr.bf16.gmra.mrb[0].mxu0 %v794
        %v850 = vpop.f32.mrb[0].mxu0
        %v851 = vadd.f32 0.0, %v850
        %v852 = vpop.f32.mrb[0].mxu0
        %v853 = vpop.f32.mrb[0].mxu0
        %v854 = vadd.f32 0.0, %v853
        %v855 = vpop.f32.mrb[0].mxu0
        %856 = vmatprep.mubr.bf16.mxu0 0
        %857 = vmatmul.mubr.bf16.gmra.mrb[0].mxu0 %v795
        %v858 = vpop.f32.mrb[0].mxu0
        %v859 = vadd.f32 0.0, %v858
        %v860 = vpop.f32.mrb[0].mxu0
        %v861 = vpop.f32.mrb[0].mxu0
        %v862 = vadd.f32 0.0, %v861
        %v863 = vpop.f32.mrb[0].mxu0
        %864 = vmatprep.mubr.bf16.mxu0 0
        %865 = vmatmul.mubr.bf16.gmra.mrb[0].mxu0 %v796
        %v866 = vpop.f32.mrb[0].mxu0
        %v867 = vadd.f32 0.0, %v866
        %v868 = vpop.f32.mrb[0].mxu0
        %v869 = vpop.f32.mrb[0].mxu0
        %v870 = vadd.f32 0.0, %v869
        %v871 = vpop.f32.mrb[0].mxu0
        %872 = vmatprep.mubr.bf16.mxu0 0
        %873 = vmatmul.mubr.bf16.gmra.mrb[0].mxu0 %v797
        %v874 = vpop.f32.mrb[0].mxu0
        %v875 = vadd.f32 0.0, %v874
        %v876 = vpop.f32.mrb[0].mxu0
        %v877 = vpop.f32.mrb[0].mxu0
        %v878 = vadd.f32 0.0, %v877
        %v879 = vpop.f32.mrb[0].mxu0
        %880 = vmatprep.mubr.bf16.mxu0 0
        %881 = vmatmul.mubr.bf16.gmra.mrb[0].mxu0 %v798
        %v882 = vpop.f32.mrb[0].mxu0
        %v883 = vadd.f32 0.0, %v882
        %v884 = vpop.f32.mrb[0].mxu0
        %v885 = vpop.f32.mrb[0].mxu0
        %v886 = vadd.f32 0.0, %v885
        %v887 = vpop.f32.mrb[0].mxu0
        %888 = vmatprep.mubr.bf16.mxu0 0
        %889 = vmatmul.mubr.bf16.gmra.mrb[0].mxu0 %v799
        %v890 = vpop.f32.mrb[0].mxu0
        %v891 = vadd.f32 0.0, %v890
        %v892 = vpop.f32.mrb[0].mxu0
        %v893 = vpop.f32.mrb[0].mxu0
        %v894 = vadd.f32 0.0, %v893
        %v895 = vpop.f32.mrb[0].mxu0
        %896 = vdwg.mxu0
        %v897 = vpack.c.bf16 %v838, %v835
        %v898 = vpack.c.bf16 %v846, %v843
        %v899 = vpack.c.bf16 %v854, %v851
        %v900 = vpack.c.bf16 %v862, %v859
        %v901 = vpack.c.bf16 %v870, %v867
        %v902 = vpack.c.bf16 %v878, %v875
        %v903 = vpack.c.bf16 %v886, %v883
        %v904 = vpack.c.bf16 %v894, %v891
        %v913 = vunpack.c.l.b16 %v897
        %v914 = vunpack.c.h.b16 %v897
        %v915 = vunpack.c.l.b16 %v898
        %v916 = vunpack.c.h.b16 %v898
        %v917 = vunpack.c.l.b16 %v899
        %v918 = vunpack.c.h.b16 %v899
        %v919 = vunpack.c.l.b16 %v900
        %v920 = vunpack.c.h.b16 %v900
        %v921 = vunpack.c.l.b16 %v901
        %v922 = vunpack.c.h.b16 %v901
        %v923 = vunpack.c.l.b16 %v902
        %v924 = vunpack.c.h.b16 %v902
        %v925 = vunpack.c.l.b16 %v903
        %v926 = vunpack.c.h.b16 %v903
        %v927 = vunpack.c.l.b16 %v904
        %v928 = vunpack.c.h.b16 %v904
        %v929 = vpack.c.b16 %v913, %v913
        %v930 = vpack.c.b16 %v914, %v914
        %v931 = vpack.c.b16 %v915, %v915
        %v932 = vpack.c.b16 %v916, %v916
        %v933 = vpack.c.b16 %v917, %v917
        %v934 = vpack.c.b16 %v918, %v918
        %v935 = vpack.c.b16 %v919, %v919
        %v936 = vpack.c.b16 %v920, %v920
        %v937 = vpack.c.b16 %v921, %v921
        %v938 = vpack.c.b16 %v922, %v922
        %v939 = vpack.c.b16 %v923, %v923
        %v940 = vpack.c.b16 %v924, %v924
        %v941 = vpack.c.b16 %v925, %v925
        %v942 = vpack.c.b16 %v926, %v926
        %v943 = vpack.c.b16 %v927, %v927
        %v944 = vpack.c.b16 %v928, %v928
        %961 = vst [vmem:[%s414] sm:$0xf] %v929
        %962 = vst [vmem:[%s414 + $0x4] sm:$0xf] %v930
        %963 = vst [vmem:[%s414 + $0x8] sm:$0xf] %v931
        %964 = vst [vmem:[%s414 + $0xc] sm:$0xf] %v932
        %965 = vst [vmem:[%s414 + $0x10] sm:$0xf] %v933
        %966 = vst [vmem:[%s414 + $0x14] sm:$0xf] %v934
        %967 = vst [vmem:[%s414 + $0x18] sm:$0xf] %v935
        %968 = vst [vmem:[%s414 + $0x1c] sm:$0xf] %v936
        %969 = vst [vmem:[%s414 + $0x20] sm:$0xf] %v937
        %970 = vst [vmem:[%s414 + $0x24] sm:$0xf] %v938
        %971 = vst [vmem:[%s414 + $0x28] sm:$0xf] %v939
        %972 = vst [vmem:[%s414 + $0x2c] sm:$0xf] %v940
        %973 = vst [vmem:[%s414 + $0x30] sm:$0xf] %v941
        %974 = vst [vmem:[%s414 + $0x34] sm:$0xf] %v942
        %975 = vst [vmem:[%s414 + $0x38] sm:$0xf] %v943
        %976 = vst [vmem:[%s414 + $0x3c] sm:$0xf] %v944
        %977 = vst [vmem:[%s421] sm:$0xff] %v776
        %978 = vst [vmem:[%s421 + $0x8] sm:$0xff] %v777
        %979 = vst [vmem:[%s421 + $0x10] sm:$0xff] %v778
        %980 = vst [vmem:[%s421 + $0x18] sm:$0xff] %v779
        %981 = vst [vmem:[%s421 + $0x20] sm:$0xff] %v780
        %982 = vst [vmem:[%s421 + $0x28] sm:$0xff] %v781
        %983 = vst [vmem:[%s421 + $0x30] sm:$0xff] %v782
        %984 = vst [vmem:[%s421 + $0x38] sm:$0xff] %v783
        %985 = vst [vmem:[%s421 + $0x40] sm:$0xff] %v784
        %986 = vst [vmem:[%s421 + $0x48] sm:$0xff] %v785
        %987 = vst [vmem:[%s421 + $0x50] sm:$0xff] %v786
        %988 = vst [vmem:[%s421 + $0x58] sm:$0xff] %v787
        %989 = vst [vmem:[%s421 + $0x60] sm:$0xff] %v788
        %990 = vst [vmem:[%s421 + $0x68] sm:$0xff] %v789
        %991 = vst [vmem:[%s421 + $0x70] sm:$0xff] %v790
        %992 = vst [vmem:[%s421 + $0x78] sm:$0xff] %v791
        %s993 = sand.u32 %s96, 1
        %s994 = sand.u32 %s96, 1
        %s995 = smul.addr %s994, 64
        %s996 = scalar_lea.vmem [#allocation4], %s995
        %s997 = sand.u32 %s124, 1
        %s998 = scalar_lea.sflag [#allocation6], %s997
        %s999 = sand.u32 %s124, 1
        %s1000 = smul.addr %s999, 128
        %s1001 = scalar_lea.vmem [#allocation5], %s1000
        // Predicated region
        $region111: #{attention_forward.6} parent=101 // pred_check
          %p1002 = pneg %p106
        $region112: #{attention_forward.6} parent=101 // pred_check_branch
          %1004 = sbr.rel (%p1002) target = $region114
        $region113: #{attention_forward.6} parent=101 // pred_region
          %s1005 = smul.addr %s23, 32
          %s1006 = sadd.s32 %s22, %s1005
          %s1007 = smul.addr %s1006, 4
          %s1008 = scalar_lea.vmem %s2, %s1007
          // Predicated region
          $region115: #{attention_forward.6} parent=113 // pred_check
            _
          $region116: #{attention_forward.6} parent=113 // pred_check_branch
            %1010 = sbr.rel (0) target = $region118
          $region117: #{attention_forward.6} parent=113 // pred_region
            // Predicated region
            $region119: #{attention_forward.6} parent=117 // pred_check
              _
            $region120: #{attention_forward.6} parent=117 // pred_check_branch
              %1012 = sbr.rel target = $region122
            $region121: #{attention_forward.6} parent=117 // pred_region
              // Predicated region
              $region134: #{attention_forward.6} parent=121 // pred_check
                _
              $region135: #{attention_forward.6} parent=121 // pred_check_branch
                %1057 = sbr.rel (0) target = $region137
              $region136: #{attention_forward.6} parent=121 // pred_region
                loop: start=0, step=1, limit=1
                $region138: #{attention_forward.6} parent=136 // loop_pre_header
                  _
                $region139: #{attention_forward.6} parent=136 // loop_header
                  %s1059 = sphi 0, %s1063
                  %p1060 = scmp.ge.s32.totalorder %s1059, 1
                  %s1064 = sphi %s996, %s996
                  %s1065 = sphi %s1008, %s1008
                $region140: #{attention_forward.6} parent=136 // loop_header_branch
                  %1062 = sbr.rel (%p1060) target = $region144
                $region141: #{attention_forward.6} parent=136 // loop_body
                  _
                $region142: #{attention_forward.6} parent=136 // loop_footer
                  %s1063 = sadd.s32 1, %s1059
                $region143: #{attention_forward.6} parent=136 // loop_footer_branch
                  %1058 = sbr.rel target = $region139
                $region144: #{attention_forward.6} parent=136 // loop_exit
                  _
                loop: start=0, step=1, limit=1
                $region145: #{attention_forward.6} parent=136 // loop_pre_header
                  _
                $region146: #{attention_forward.6} parent=136 // loop_header
                  %s1068 = sphi 0, %s1072
                  %p1069 = scmp.ge.s32.totalorder %s1068, 1
                  %s1073 = sphi %s996, %s996
                  %s1074 = sphi %s1008, %s1008
                $region147: #{attention_forward.6} parent=136 // loop_header_branch
                  %1071 = sbr.rel (%p1069) target = $region151
                $region148: #{attention_forward.6} parent=136 // loop_body
                  %v1075 = vld [vmem:[%s1073] sm:$0xf]
                  %1076 = vst [vmem:[%s1074] sm:$0xf] %v1075
                  %v1077 = vld [vmem:[%s1073 + $0x4] sm:$0xf]
                  %1078 = vst [vmem:[%s1074 + $0x8] sm:$0xf] %v1077
                  %v1079 = vld [vmem:[%s1073 + $0x8] sm:$0xf]
                  %1080 = vst [vmem:[%s1074 + $0x10] sm:$0xf] %v1079
                  %v1081 = vld [vmem:[%s1073 + $0xc] sm:$0xf]
                  %1082 = vst [vmem:[%s1074 + $0x18] sm:$0xf] %v1081
                  %v1083 = vld [vmem:[%s1073 + $0x10] sm:$0xf]
                  %1084 = vst [vmem:[%s1074 + $0x20] sm:$0xf] %v1083
                  %v1085 = vld [vmem:[%s1073 + $0x14] sm:$0xf]
                  %1086 = vst [vmem:[%s1074 + $0x28] sm:$0xf] %v1085
                  %v1087 = vld [vmem:[%s1073 + $0x18] sm:$0xf]
                  %1088 = vst [vmem:[%s1074 + $0x30] sm:$0xf] %v1087
                  %v1089 = vld [vmem:[%s1073 + $0x1c] sm:$0xf]
                  %1090 = vst [vmem:[%s1074 + $0x38] sm:$0xf] %v1089
                  %v1091 = vld [vmem:[%s1073 + $0x20] sm:$0xf]
                  %1092 = vst [vmem:[%s1074 + $0x40] sm:$0xf] %v1091
                  %v1093 = vld [vmem:[%s1073 + $0x24] sm:$0xf]
                  %1094 = vst [vmem:[%s1074 + $0x48] sm:$0xf] %v1093
                  %v1095 = vld [vmem:[%s1073 + $0x28] sm:$0xf]
                  %1096 = vst [vmem:[%s1074 + $0x50] sm:$0xf] %v1095
                  %v1097 = vld [vmem:[%s1073 + $0x2c] sm:$0xf]
                  %1098 = vst [vmem:[%s1074 + $0x58] sm:$0xf] %v1097
                  %v1099 = vld [vmem:[%s1073 + $0x30] sm:$0xf]
                  %1100 = vst [vmem:[%s1074 + $0x60] sm:$0xf] %v1099
                  %v1101 = vld [vmem:[%s1073 + $0x34] sm:$0xf]
                  %1102 = vst [vmem:[%s1074 + $0x68] sm:$0xf] %v1101
                  %v1103 = vld [vmem:[%s1073 + $0x38] sm:$0xf]
                  %1104 = vst [vmem:[%s1074 + $0x70] sm:$0xf] %v1103
                  %v1105 = vld [vmem:[%s1073 + $0x3c] sm:$0xf]
                  %1106 = vst [vmem:[%s1074 + $0x78] sm:$0xf] %v1105
                $region149: #{attention_forward.6} parent=136 // loop_footer
                  %s1072 = sadd.s32 1, %s1068
                $region150: #{attention_forward.6} parent=136 // loop_footer_branch
                  %1067 = sbr.rel target = $region146
                $region151: #{attention_forward.6} parent=136 // loop_exit
                  _
              $region137: #{attention_forward.6} parent=121 // pred_fallthru
                _
            $region122: #{attention_forward.6} parent=117 // pred_fallthru
              _
            // Predicated region
            $region123: #{attention_forward.6} parent=117 // pred_check
              _
            $region124: #{attention_forward.6} parent=117 // pred_check_branch
              %1014 = sbr.rel (0) target = $region126
            $region125: #{attention_forward.6} parent=117 // pred_region
              loop: start=0, step=1, limit=1
              $region127: #{attention_forward.6} parent=125 // loop_pre_header
                _
              $region128: #{attention_forward.6} parent=125 // loop_header
                %s1017 = sphi 0, %s1021
                %p1018 = scmp.ge.s32.totalorder %s1017, 1
                %s1022 = sphi %s996, %s996
                %s1023 = sphi %s1008, %s1008
              $region129: #{attention_forward.6} parent=125 // loop_header_branch
                %1020 = sbr.rel (%p1018) target = $region133
              $region130: #{attention_forward.6} parent=125 // loop_body
                %v1024 = vld [vmem:[%s1022] sm:$0xf]
                %1025 = vst [vmem:[%s1023] sm:$0xf] %v1024
                %v1026 = vld [vmem:[%s1022 + $0x4] sm:$0xf]
                %1027 = vst [vmem:[%s1023 + $0x8] sm:$0xf] %v1026
                %v1028 = vld [vmem:[%s1022 + $0x8] sm:$0xf]
                %1029 = vst [vmem:[%s1023 + $0x10] sm:$0xf] %v1028
                %v1030 = vld [vmem:[%s1022 + $0xc] sm:$0xf]
                %1031 = vst [vmem:[%s1023 + $0x18] sm:$0xf] %v1030
                %v1032 = vld [vmem:[%s1022 + $0x10] sm:$0xf]
                %1033 = vst [vmem:[%s1023 + $0x20] sm:$0xf] %v1032
                %v1034 = vld [vmem:[%s1022 + $0x14] sm:$0xf]
                %1035 = vst [vmem:[%s1023 + $0x28] sm:$0xf] %v1034
                %v1036 = vld [vmem:[%s1022 + $0x18] sm:$0xf]
                %1037 = vst [vmem:[%s1023 + $0x30] sm:$0xf] %v1036
                %v1038 = vld [vmem:[%s1022 + $0x1c] sm:$0xf]
                %1039 = vst [vmem:[%s1023 + $0x38] sm:$0xf] %v1038
                %v1040 = vld [vmem:[%s1022 + $0x20] sm:$0xf]
                %1041 = vst [vmem:[%s1023 + $0x40] sm:$0xf] %v1040
                %v1042 = vld [vmem:[%s1022 + $0x24] sm:$0xf]
                %1043 = vst [vmem:[%s1023 + $0x48] sm:$0xf] %v1042
                %v1044 = vld [vmem:[%s1022 + $0x28] sm:$0xf]
                %1045 = vst [vmem:[%s1023 + $0x50] sm:$0xf] %v1044
                %v1046 = vld [vmem:[%s1022 + $0x2c] sm:$0xf]
                %1047 = vst [vmem:[%s1023 + $0x58] sm:$0xf] %v1046
                %v1048 = vld [vmem:[%s1022 + $0x30] sm:$0xf]
                %1049 = vst [vmem:[%s1023 + $0x60] sm:$0xf] %v1048
                %v1050 = vld [vmem:[%s1022 + $0x34] sm:$0xf]
                %1051 = vst [vmem:[%s1023 + $0x68] sm:$0xf] %v1050
                %v1052 = vld [vmem:[%s1022 + $0x38] sm:$0xf]
                %1053 = vst [vmem:[%s1023 + $0x70] sm:$0xf] %v1052
                %v1054 = vld [vmem:[%s1022 + $0x3c] sm:$0xf]
                %1055 = vst [vmem:[%s1023 + $0x78] sm:$0xf] %v1054
              $region131: #{attention_forward.6} parent=125 // loop_footer
                %s1021 = sadd.s32 1, %s1017
              $region132: #{attention_forward.6} parent=125 // loop_footer_branch
                %1016 = sbr.rel target = $region128
              $region133: #{attention_forward.6} parent=125 // loop_exit
                _
            $region126: #{attention_forward.6} parent=117 // pred_fallthru
              _
          $region118: #{attention_forward.6} parent=113 // pred_fallthru
            _
          %1107 = vnop
        $region114: #{attention_forward.6} parent=101 // pred_fallthru
          _
        // Predicated region
        $region152: #{attention_forward.6} parent=101 // pred_check
          %p1108 = pneg %p134
        $region153: #{attention_forward.6} parent=101 // pred_check_branch
          %1110 = sbr.rel (%p1108) target = $region155
        $region154: #{attention_forward.6} parent=101 // pred_region
          %s1112 = ssub.s32 2048, 2048
          %1113 = vsyncadd %s998, %s1112
          %s1114 = smul.addr %s23, 16
          %s1115 = smul.addr %s22, 64
          %s1116 = sadd.s32 %s1114, %s1115
          %s1117 = smul.addr %s1116, 128
          %s1118 = scalar_lea.hbm %s3, %s1117
          %s1119 = sshll.u32 %s1001, 4
          %s1120 = int_to_ptr.vmem [resolvable:$true] %s1119
          %1125 = dma.vmem_to_hbm [thread:$0]  %s1120, 2048, %s1118, %s998, 128, 128, 8
        $region155: #{attention_forward.6} parent=101 // pred_fallthru
          _
      $region102: #{attention_forward.6} parent=5 // pred_fallthru
        _
      %p1126 = scmp.le.s32.totalorder 2, %s13
      // Predicated region
      $region156: #{attention_forward.6} parent=5 // pred_check
        %p1127 = pneg %p1126
      $region157: #{attention_forward.6} parent=5 // pred_check_branch
        %1129 = sbr.rel (%p1127) target = $region159
      $region158: #{attention_forward.6} parent=5 // pred_region
        %s1130 = ssub.s32 %s13, 2
        // Predicated region
        $region160: #{attention_forward.6} parent=158 // pred_check
          %p1131 = pneg %p112
        $region161: #{attention_forward.6} parent=158 // pred_check_branch
          %1133 = sbr.rel (%p1131) target = $region163
        $region162: #{attention_forward.6} parent=158 // pred_region
          %s1134 = sand.u32 %s97, 1
          %s1135 = sand.u32 %s97, 1
          %s1136 = smul.addr %s1135, 64
          %s1137 = scalar_lea.vmem [#allocation4], %s1136
        $region163: #{attention_forward.6} parent=158 // pred_fallthru
          _
        // Predicated region
        $region164: #{attention_forward.6} parent=158 // pred_check
          %p1138 = pneg %p140
        $region165: #{attention_forward.6} parent=158 // pred_check_branch
          %1140 = sbr.rel (%p1138) target = $region167
        $region166: #{attention_forward.6} parent=158 // pred_region
          %s1141 = sand.u32 %s125, 1
          %s1142 = scalar_lea.sflag [#allocation6], %s1141
          %s1143 = sand.u32 %s125, 1
          %s1144 = smul.addr %s1143, 128
          %s1145 = scalar_lea.vmem [#allocation5], %s1144
          %1146 = dma.done %s1142, 2048
        $region167: #{attention_forward.6} parent=158 // pred_fallthru
          _
      $region159: #{attention_forward.6} parent=5 // pred_fallthru
        _
    $region6: #{attention_forward.6} parent=1 // loop_footer
      %s17 = sadd.s32 1, %s13
    $region7: #{attention_forward.6} parent=1 // loop_footer_branch
      %12 = sbr.rel target = $region3
    $region8: #{attention_forward.6} parent=1 // loop_exit
      _
    %1147 = vsyncpa [#allocation6], 1
    %s1148 = scalar_lea.sflag [#allocation6], 1
    %1149 = vsyncpa %s1148, 1

// kernel: attention_forward.7
$region0: #{attention_forward.7}
  #allocation0 [shape = 'u32[]', space=smem, size = 0x4, offset = 0x4, fixed_abs, tag = 'smem constant byte address 0x4 - core index']
  #allocation1 [shape = 'u32[144,128]{1,0:T(1,128)}', space=vmem, size = 0x12000, scoped, tag = 'internal scratch']
  %s0 = inlined_call_operand.vmem [shape: bf16[512,256], index: 0, kind: input, shape index: {}]
  %s1 = inlined_call_operand.vmem [shape: bf16[256,256], index: 1, kind: input, shape index: {}]
  %s2 = inlined_call_operand.vmem [shape: f32[1,256], index: 2, kind: input, shape index: {}]
  %s3 = inlined_call_operand.hbm [shape: f32[512,256], index: 3, kind: output, shape index: {}]
  %s4 = sld [smem:[#allocation0]]
  $region45: #{attention_forward.7} parent=0
    _
  %s6 = ssub.s32 1, %s4
  %s7 = scalar_select 0, %s6, %s4
  $region1: #{attention_forward.7} parent=0
    #allocation2 [shape = 'u8[524288]{0}', space=vmem, size = 0x80000, scoped, tag = 'output window, operand 0']
    #allocation3 [shape = 's32[2]{0}', space=sflag, size = 0x8, scoped, tag = 'scoped memory for attention_forward.7']
    %8 = vsyncpa [#allocation3], 0
    %s9 = scalar_lea.sflag [#allocation3], 1
    %10 = vsyncpa %s9, 0
    loop: start=0, step=1, limit=4
    $region2: #{attention_forward.7} parent=1 // loop_pre_header
      _
    $region3: #{attention_forward.7} parent=1 // loop_header
      %s12 = sphi 0, %s16
      %p13 = scmp.ge.s32.totalorder %s12, 4
      %s22 = sphi 0, %s24
      %s25 = sphi 0, %s22
      %s26 = sphi 0, %s25
      %s42 = sphi 0, %s26
      %s46 = sphi 0, %s46
      %s48 = sphi 0, %s46
      %s49 = sphi 0, %s48
      %s63 = sphi 0, %s49
      %s67 = sphi 0, %s67
      %s69 = sphi 0, %s67
      %s70 = sphi 0, %s69
      %s84 = sphi 0, %s70
      %s90 = sphi 0, %s92
      %s93 = sphi 0, %s90
      %s94 = sphi 0, %s93
      %s110 = sphi 0, %s94
    $region4: #{attention_forward.7} parent=1 // loop_header_branch
      %15 = sbr.rel (%p13) target = $region8
    $region5: #{attention_forward.7} parent=1 // loop_body
      %s17 = ssub.s32 %s12, 1
      %s18 = ssub.s32 %s12, 2
      %s19 = sadd.s32 %s12, 1
      %s20 = ssub.s32 %s12, %s19
      %p21 = scmp.eq.s32.totalorder %s20, 0
      %s23 = sadd.s32 %s22, 1
      %s24 = scalar_select %p21, %s22, %s23
      %p27 = pneg %p21
      %p28 = scmp.eq.s32.totalorder %s12, 1
      %p29 = por %p27, %p28
      %p30 = scmp.ne.s32.totalorder %s22, %s25
      %p31 = scmp.eq.s32.totalorder %s12, 0
      %p32 = por %p30, %p31
      %p33 = scmp.ne.s32.totalorder %s22, %s25
      %p34 = scmp.eq.s32.totalorder %s17, 1
      %p35 = por %p33, %p34
      %p36 = scmp.ne.s32.totalorder %s25, %s26
      %p37 = scmp.eq.s32.totalorder %s17, 0
      %p38 = por %p36, %p37
      %p39 = scmp.ne.s32.totalorder %s25, %s26
      %p40 = scmp.eq.s32.totalorder %s18, 1
      %p41 = por %p39, %p40
      %p43 = scmp.ne.s32.totalorder %s26, %s42
      %p44 = scmp.eq.s32.totalorder %s18, 0
      %p45 = por %p43, %p44
      %s47 = sadd.s32 %s46, 1
      %p50 = scmp.eq.s32.totalorder %s12, 1
      %p51 = scmp.ne.s32.totalorder %s46, %s48
      %p52 = scmp.eq.s32.totalorder %s12, 0
      %p53 = por %p51, %p52
      %p54 = scmp.ne.s32.totalorder %s46, %s48
      %p55 = scmp.eq.s32.totalorder %s17, 1
      %p56 = por %p54, %p55
      %p57 = scmp.ne.s32.totalorder %s48, %s49
      %p58 = scmp.eq.s32.totalorder %s17, 0
      %p59 = por %p57, %p58
      %p60 = scmp.ne.s32.totalorder %s48, %s49
      %p61 = scmp.eq.s32.totalorder %s18, 1
      %p62 = por %p60, %p61
      %p64 = scmp.ne.s32.totalorder %s49, %s63
      %p65 = scmp.eq.s32.totalorder %s18, 0
      %p66 = por %p64, %p65
      %s68 = sadd.s32 %s67, 1
      %p71 = scmp.eq.s32.totalorder %s12, 1
      %p72 = scmp.ne.s32.totalorder %s67, %s69
      %p73 = scmp.eq.s32.totalorder %s12, 0
      %p74 = por %p72, %p73
      %p75 = scmp.ne.s32.totalorder %s67, %s69
      %p76 = scmp.eq.s32.totalorder %s17, 1
      %p77 = por %p75, %p76
      %p78 = scmp.ne.s32.totalorder %s69, %s70
      %p79 = scmp.eq.s32.totalorder %s17, 0
      %p80 = por %p78, %p79
      %p81 = scmp.ne.s32.totalorder %s69, %s70
      %p82 = scmp.eq.s32.totalorder %s18, 1
      %p83 = por %p81, %p82
      %p85 = scmp.ne.s32.totalorder %s70, %s84
      %p86 = scmp.eq.s32.totalorder %s18, 0
      %p87 = por %p85, %p86
      %s88 = ssub.s32 %s12, %s19
      %p89 = scmp.eq.s32.totalorder %s88, 0
      %s91 = sadd.s32 %s90, 1
      %s92 = scalar_select %p89, %s90, %s91
      %p95 = pneg %p89
      %p96 = scmp.eq.s32.totalorder %s12, 1
      %p97 = por %p95, %p96
      %p98 = scmp.ne.s32.totalorder %s90, %s93
      %p99 = scmp.eq.s32.totalorder %s12, 0
      %p100 = por %p98, %p99
      %p101 = scmp.ne.s32.totalorder %s90, %s93
      %p102 = scmp.eq.s32.totalorder %s17, 1
      %p103 = por %p101, %p102
      %p104 = scmp.ne.s32.totalorder %s93, %s94
      %p105 = scmp.eq.s32.totalorder %s17, 0
      %p106 = por %p104, %p105
      %p107 = scmp.ne.s32.totalorder %s93, %s94
      %p108 = scmp.eq.s32.totalorder %s18, 1
      %p109 = por %p107, %p108
      %p111 = scmp.ne.s32.totalorder %s94, %s110
      %p112 = scmp.eq.s32.totalorder %s18, 0
      %p113 = por %p111, %p112
      %p114 = scmp.le.s32.totalorder 1, %s12
      %p115 = scmp.lt.s32.totalorder %s12, 3
      %p116 = pnand %p114, %p115
      %p117 = pneg %p116
      // Predicated region
      $region9: #{attention_forward.7} parent=5 // pred_check
        _
      $region10: #{attention_forward.7} parent=5 // pred_check_branch
        %119 = sbr.rel (%p116) target = $region12
      $region11: #{attention_forward.7} parent=5 // pred_region
        %s120 = ssub.s32 %s12, 1
        // Predicated region
        $region13: #{attention_forward.7} parent=11 // pred_check
          %p121 = pneg %p59
        $region14: #{attention_forward.7} parent=11 // pred_check_branch
          %123 = sbr.rel (%p121) target = $region16
        $region15: #{attention_forward.7} parent=11 // pred_region
          _
        $region16: #{attention_forward.7} parent=11 // pred_fallthru
          _
        // Predicated region
        $region17: #{attention_forward.7} parent=11 // pred_check
          %p124 = pneg %p80
        $region18: #{attention_forward.7} parent=11 // pred_check_branch
          %126 = sbr.rel (%p124) target = $region20
        $region19: #{attention_forward.7} parent=11 // pred_region
          _
        $region20: #{attention_forward.7} parent=11 // pred_fallthru
          _
      $region12: #{attention_forward.7} parent=5 // pred_fallthru
        _
      %p127 = scmp.lt.s32.totalorder %s12, 2
      // Predicated region
      $region21: #{attention_forward.7} parent=5 // pred_check
        %p128 = pneg %p127
      $region22: #{attention_forward.7} parent=5 // pred_check_branch
        %130 = sbr.rel (%p128) target = $region24
      $region23: #{attention_forward.7} parent=5 // pred_region
        // Predicated region
        $region25: #{attention_forward.7} parent=23 // pred_check
          %p131 = pneg %p32
        $region26: #{attention_forward.7} parent=23 // pred_check_branch
          %133 = sbr.rel (%p131) target = $region28
        $region27: #{attention_forward.7} parent=23 // pred_region
          %s134 = smul.u32 32, %s12
          %p135 = scmp.lt.s32.totalorder %s134, 63
          %s136 = scalar_select %p135, %s134, 63
          %s137 = smul.addr %s136, 2
          %s138 = smul.addr %s137, 4
          %s139 = scalar_lea.vmem %s0, %s138
          %s140 = smul.u32 32, %s12
        $region28: #{attention_forward.7} parent=23 // pred_fallthru
          _
      $region24: #{attention_forward.7} parent=5 // pred_fallthru
        _
      %p141 = scmp.le.s32.totalorder 1, %s12
      %p142 = scmp.lt.s32.totalorder %s12, 3
      %p143 = pnand %p141, %p142
      %p144 = pneg %p143
      // Predicated region
      $region29: #{attention_forward.7} parent=5 // pred_check
        _
      $region30: #{attention_forward.7} parent=5 // pred_check_branch
        %146 = sbr.rel (%p143) target = $region32
      $region31: #{attention_forward.7} parent=5 // pred_region
        %s147 = ssub.s32 %s12, 1
        %s148 = smul.u32 32, %s17
        %p149 = scmp.lt.s32.totalorder %s148, 63
        %s150 = scalar_select %p149, %s148, 63
        %s151 = smul.addr %s150, 2
        %s152 = smul.addr %s151, 4
        %s153 = scalar_lea.vmem %s0, %s152
        %p154 = pneg %p38
        %p155 = pneg %p35
        %p156 = pneg %p59
        %p157 = pneg %p56
        %p158 = pneg %p80
        %p159 = pneg %p77
        %p160 = pneg %p106
        %p161 = pneg %p103
        %s162 = sand.u32 %s93, 1
        %s163 = scalar_lea.sflag [#allocation3], %s162
        %s164 = sand.u32 %s93, 1
        %s165 = smul.addr %s164, 512
        %s166 = scalar_lea.vmem [#allocation2], %s165
        %s167 = smul.u32 32, %s17
        %p168 = scmp.lt.s32.totalorder %s167, 63
        %s169 = scalar_select %p168, %s167, 63
        %s170 = smul.addr %s169, 2
        %s171 = smul.addr %s170, 4
        %s172 = scalar_lea.vmem %s0, %s171
        %s173 = smul.u32 32, %s17
        %s174 = smul.u32 32, %s17
        %v175 = vld [vmem:[%s172] sm:$0xff]
        %v176 = vld [vmem:[%s172 + $0x8] sm:$0xff]
        %v177 = vld [vmem:[%s172 + $0x10] sm:$0xff]
        %v178 = vld [vmem:[%s172 + $0x18] sm:$0xff]
        %v179 = vld [vmem:[%s172 + $0x20] sm:$0xff]
        %v180 = vld [vmem:[%s172 + $0x28] sm:$0xff]
        %v181 = vld [vmem:[%s172 + $0x30] sm:$0xff]
        %v182 = vld [vmem:[%s172 + $0x38] sm:$0xff]
        %v183 = vld [vmem:[%s172 + $0x40] sm:$0xff]
        %v184 = vld [vmem:[%s172 + $0x48] sm:$0xff]
        %v185 = vld [vmem:[%s172 + $0x50] sm:$0xff]
        %v186 = vld [vmem:[%s172 + $0x58] sm:$0xff]
        %v187 = vld [vmem:[%s172 + $0x60] sm:$0xff]
        %v188 = vld [vmem:[%s172 + $0x68] sm:$0xff]
        %v189 = vld [vmem:[%s172 + $0x70] sm:$0xff]
        %v190 = vld [vmem:[%s172 + $0x78] sm:$0xff]
        %v191 = vld [vmem:[%s172 + $0x80] sm:$0xff]
        %v192 = vld [vmem:[%s172 + $0x88] sm:$0xff]
        %v193 = vld [vmem:[%s172 + $0x90] sm:$0xff]
        %v194 = vld [vmem:[%s172 + $0x98] sm:$0xff]
        %v195 = vld [vmem:[%s172 + $0xa0] sm:$0xff]
        %v196 = vld [vmem:[%s172 + $0xa8] sm:$0xff]
        %v197 = vld [vmem:[%s172 + $0xb0] sm:$0xff]
        %v198 = vld [vmem:[%s172 + $0xb8] sm:$0xff]
        %v199 = vld [vmem:[%s172 + $0xc0] sm:$0xff]
        %v200 = vld [vmem:[%s172 + $0xc8] sm:$0xff]
        %v201 = vld [vmem:[%s172 + $0xd0] sm:$0xff]
        %v202 = vld [vmem:[%s172 + $0xd8] sm:$0xff]
        %v203 = vld [vmem:[%s172 + $0xe0] sm:$0xff]
        %v204 = vld [vmem:[%s172 + $0xe8] sm:$0xff]
        %v205 = vld [vmem:[%s172 + $0xf0] sm:$0xff]
        %v206 = vld [vmem:[%s172 + $0xf8] sm:$0xff]
        %v207 = vld [vmem:[%s1] sm:$0xff]
        %v208 = vld [vmem:[%s1 + $0x8] sm:$0xff]
        %v209 = vld [vmem:[%s1 + $0x10] sm:$0xff]
        %v210 = vld [vmem:[%s1 + $0x18] sm:$0xff]
        %v211 = vld [vmem:[%s1 + $0x20] sm:$0xff]
        %v212 = vld [vmem:[%s1 + $0x28] sm:$0xff]
        %v213 = vld [vmem:[%s1 + $0x30] sm:$0xff]
        %v214 = vld [vmem:[%s1 + $0x38] sm:$0xff]
        %v215 = vld [vmem:[%s1 + $0x40] sm:$0xff]
        %v216 = vld [vmem:[%s1 + $0x48] sm:$0xff]
        %v217 = vld [vmem:[%s1 + $0x50] sm:$0xff]
        %v218 = vld [vmem:[%s1 + $0x58] sm:$0xff]
        %v219 = vld [vmem:[%s1 + $0x60] sm:$0xff]
        %v220 = vld [vmem:[%s1 + $0x68] sm:$0xff]
        %v221 = vld [vmem:[%s1 + $0x70] sm:$0xff]
        %v222 = vld [vmem:[%s1 + $0x78] sm:$0xff]
        %v223 = vld [vmem:[%s1 + $0x80] sm:$0xff]
        %v224 = vld [vmem:[%s1 + $0x88] sm:$0xff]
        %v225 = vld [vmem:[%s1 + $0x90] sm:$0xff]
        %v226 = vld [vmem:[%s1 + $0x98] sm:$0xff]
        %v227 = vld [vmem:[%s1 + $0xa0] sm:$0xff]
        %v228 = vld [vmem:[%s1 + $0xa8] sm:$0xff]
        %v229 = vld [vmem:[%s1 + $0xb0] sm:$0xff]
        %v230 = vld [vmem:[%s1 + $0xb8] sm:$0xff]
        %v231 = vld [vmem:[%s1 + $0xc0] sm:$0xff]
        %v232 = vld [vmem:[%s1 + $0xc8] sm:$0xff]
        %v233 = vld [vmem:[%s1 + $0xd0] sm:$0xff]
        %v234 = vld [vmem:[%s1 + $0xd8] sm:$0xff]
        %v235 = vld [vmem:[%s1 + $0xe0] sm:$0xff]
        %v236 = vld [vmem:[%s1 + $0xe8] sm:$0xff]
        %v237 = vld [vmem:[%s1 + $0xf0] sm:$0xff]
        %v238 = vld [vmem:[%s1 + $0xf8] sm:$0xff]
        %v239 = vld [vmem:[%s2] sm:$0x3]
        %v241 = vlaneseq
        %v242 = vshrl.u32 %v241, 7
        %v243 = vsub.s32 0, %v242
        %v244 = vrot.slane %v239, %v243
        %v245 = vlaneseq
        %v246 = vshrl.u32 %v245, 7
        %v247 = vsub.s32 1, %v246
        %v248 = vrot.slane %v239, %v247
        %v283 = vunpack.c.l.b16 %v175
        %v284 = vunpack.c.h.b16 %v175
        %v285 = vunpack.c.l.b16 %v176
        %v286 = vunpack.c.h.b16 %v176
        %v287 = vunpack.c.l.b16 %v177
        %v288 = vunpack.c.h.b16 %v177
        %v289 = vunpack.c.l.b16 %v178
        %v290 = vunpack.c.h.b16 %v178
        %v291 = vunpack.c.l.b16 %v179
        %v292 = vunpack.c.h.b16 %v179
        %v293 = vunpack.c.l.b16 %v180
        %v294 = vunpack.c.h.b16 %v180
        %v295 = vunpack.c.l.b16 %v181
        %v296 = vunpack.c.h.b16 %v181
        %v297 = vunpack.c.l.b16 %v182
        %v298 = vunpack.c.h.b16 %v182
        %v299 = vunpack.c.l.b16 %v183
        %v300 = vunpack.c.h.b16 %v183
        %v301 = vunpack.c.l.b16 %v184
        %v302 = vunpack.c.h.b16 %v184
        %v303 = vunpack.c.l.b16 %v185
        %v304 = vunpack.c.h.b16 %v185
        %v305 = vunpack.c.l.b16 %v186
        %v306 = vunpack.c.h.b16 %v186
        %v307 = vunpack.c.l.b16 %v187
        %v308 = vunpack.c.h.b16 %v187
        %v309 = vunpack.c.l.b16 %v188
        %v310 = vunpack.c.h.b16 %v188
        %v311 = vunpack.c.l.b16 %v189
        %v312 = vunpack.c.h.b16 %v189
        %v313 = vunpack.c.l.b16 %v190
        %v314 = vunpack.c.h.b16 %v190
        %v315 = vunpack.c.l.b16 %v191
        %v316 = vunpack.c.h.b16 %v191
        %v317 = vunpack.c.l.b16 %v192
        %v318 = vunpack.c.h.b16 %v192
        %v319 = vunpack.c.l.b16 %v193
        %v320 = vunpack.c.h.b16 %v193
        %v321 = vunpack.c.l.b16 %v194
        %v322 = vunpack.c.h.b16 %v194
        %v323 = vunpack.c.l.b16 %v195
        %v324 = vunpack.c.h.b16 %v195
        %v325 = vunpack.c.l.b16 %v196
        %v326 = vunpack.c.h.b16 %v196
        %v327 = vunpack.c.l.b16 %v197
        %v328 = vunpack.c.h.b16 %v197
        %v329 = vunpack.c.l.b16 %v198
        %v330 = vunpack.c.h.b16 %v198
        %v331 = vunpack.c.l.b16 %v199
        %v332 = vunpack.c.h.b16 %v199
        %v333 = vunpack.c.l.b16 %v200
        %v334 = vunpack.c.h.b16 %v200
        %v335 = vunpack.c.l.b16 %v201
        %v336 = vunpack.c.h.b16 %v201
        %v337 = vunpack.c.l.b16 %v202
        %v338 = vunpack.c.h.b16 %v202
        %v339 = vunpack.c.l.b16 %v203
        %v340 = vunpack.c.h.b16 %v203
        %v341 = vunpack.c.l.b16 %v204
        %v342 = vunpack.c.h.b16 %v204
        %v343 = vunpack.c.l.b16 %v205
        %v344 = vunpack.c.h.b16 %v205
        %v345 = vunpack.c.l.b16 %v206
        %v346 = vunpack.c.h.b16 %v206
        %v347 = vpack.c.b16 %v285, %v283
        %v348 = vpack.c.b16 %v286, %v284
        %v349 = vpack.c.b16 %v289, %v287
        %v350 = vpack.c.b16 %v290, %v288
        %v351 = vpack.c.b16 %v293, %v291
        %v352 = vpack.c.b16 %v294, %v292
        %v353 = vpack.c.b16 %v297, %v295
        %v354 = vpack.c.b16 %v298, %v296
        %v355 = vpack.c.b16 %v301, %v299
        %v356 = vpack.c.b16 %v302, %v300
        %v357 = vpack.c.b16 %v305, %v303
        %v358 = vpack.c.b16 %v306, %v304
        %v359 = vpack.c.b16 %v309, %v307
        %v360 = vpack.c.b16 %v310, %v308
        %v361 = vpack.c.b16 %v313, %v311
        %v362 = vpack.c.b16 %v314, %v312
        %v363 = vpack.c.b16 %v317, %v315
        %v364 = vpack.c.b16 %v318, %v316
        %v365 = vpack.c.b16 %v321, %v319
        %v366 = vpack.c.b16 %v322, %v320
        %v367 = vpack.c.b16 %v325, %v323
        %v368 = vpack.c.b16 %v326, %v324
        %v369 = vpack.c.b16 %v329, %v327
        %v370 = vpack.c.b16 %v330, %v328
        %v371 = vpack.c.b16 %v333, %v331
        %v372 = vpack.c.b16 %v334, %v332
        %v373 = vpack.c.b16 %v337, %v335
        %v374 = vpack.c.b16 %v338, %v336
        %v375 = vpack.c.b16 %v341, %v339
        %v376 = vpack.c.b16 %v342, %v340
        %v377 = vpack.c.b16 %v345, %v343
        %v378 = vpack.c.b16 %v346, %v344
        %v443 = vunpack.c.l.b16 %v207
        %v444 = vunpack.c.h.b16 %v207
        %v445 = vunpack.c.l.b16 %v208
        %v446 = vunpack.c.h.b16 %v208
        %v447 = vunpack.c.l.b16 %v209
        %v448 = vunpack.c.h.b16 %v209
        %v449 = vunpack.c.l.b16 %v210
        %v450 = vunpack.c.h.b16 %v210
        %v451 = vunpack.c.l.b16 %v211
        %v452 = vunpack.c.h.b16 %v211
        %v453 = vunpack.c.l.b16 %v212
        %v454 = vunpack.c.h.b16 %v212
        %v455 = vunpack.c.l.b16 %v213
        %v456 = vunpack.c.h.b16 %v213
        %v457 = vunpack.c.l.b16 %v214
        %v458 = vunpack.c.h.b16 %v214
        %v459 = vunpack.c.l.b16 %v215
        %v460 = vunpack.c.h.b16 %v215
        %v461 = vunpack.c.l.b16 %v216
        %v462 = vunpack.c.h.b16 %v216
        %v463 = vunpack.c.l.b16 %v217
        %v464 = vunpack.c.h.b16 %v217
        %v465 = vunpack.c.l.b16 %v218
        %v466 = vunpack.c.h.b16 %v218
        %v467 = vunpack.c.l.b16 %v219
        %v468 = vunpack.c.h.b16 %v219
        %v469 = vunpack.c.l.b16 %v220
        %v470 = vunpack.c.h.b16 %v220
        %v471 = vunpack.c.l.b16 %v221
        %v472 = vunpack.c.h.b16 %v221
        %v473 = vunpack.c.l.b16 %v222
        %v474 = vunpack.c.h.b16 %v222
        %v475 = vunpack.c.l.b16 %v223
        %v476 = vunpack.c.h.b16 %v223
        %v477 = vunpack.c.l.b16 %v224
        %v478 = vunpack.c.h.b16 %v224
        %v479 = vunpack.c.l.b16 %v225
        %v480 = vunpack.c.h.b16 %v225
        %v481 = vunpack.c.l.b16 %v226
        %v482 = vunpack.c.h.b16 %v226
        %v483 = vunpack.c.l.b16 %v227
        %v484 = vunpack.c.h.b16 %v227
        %v485 = vunpack.c.l.b16 %v228
        %v486 = vunpack.c.h.b16 %v228
        %v487 = vunpack.c.l.b16 %v229
        %v488 = vunpack.c.h.b16 %v229
        %v489 = vunpack.c.l.b16 %v230
        %v490 = vunpack.c.h.b16 %v230
        %v491 = vunpack.c.l.b16 %v231
        %v492 = vunpack.c.h.b16 %v231
        %v493 = vunpack.c.l.b16 %v232
        %v494 = vunpack.c.h.b16 %v232
        %v495 = vunpack.c.l.b16 %v233
        %v496 = vunpack.c.h.b16 %v233
        %v497 = vunpack.c.l.b16 %v234
        %v498 = vunpack.c.h.b16 %v234
        %v499 = vunpack.c.l.b16 %v235
        %v500 = vunpack.c.h.b16 %v235
        %v501 = vunpack.c.l.b16 %v236
        %v502 = vunpack.c.h.b16 %v236
        %v503 = vunpack.c.l.b16 %v237
        %v504 = vunpack.c.h.b16 %v237
        %v505 = vunpack.c.l.b16 %v238
        %v506 = vunpack.c.h.b16 %v238
        %v507 = vpack.c.b16 %v445, %v443
        %v508 = vpack.c.b16 %v446, %v444
        %v509 = vpack.c.b16 %v449, %v447
        %v510 = vpack.c.b16 %v450, %v448
        %v511 = vpack.c.b16 %v453, %v451
        %v512 = vpack.c.b16 %v454, %v452
        %v513 = vpack.c.b16 %v457, %v455
        %v514 = vpack.c.b16 %v458, %v456
        %v515 = vpack.c.b16 %v461, %v459
        %v516 = vpack.c.b16 %v462, %v460
        %v517 = vpack.c.b16 %v465, %v463
        %v518 = vpack.c.b16 %v466, %v464
        %v519 = vpack.c.b16 %v469, %v467
        %v520 = vpack.c.b16 %v470, %v468
        %v521 = vpack.c.b16 %v473, %v471
        %v522 = vpack.c.b16 %v474, %v472
        %v523 = vpack.c.b16 %v477, %v475
        %v524 = vpack.c.b16 %v478, %v476
        %v525 = vpack.c.b16 %v481, %v479
        %v526 = vpack.c.b16 %v482, %v480
        %v527 = vpack.c.b16 %v485, %v483
        %v528 = vpack.c.b16 %v486, %v484
        %v529 = vpack.c.b16 %v489, %v487
        %v530 = vpack.c.b16 %v490, %v488
        %v531 = vpack.c.b16 %v493, %v491
        %v532 = vpack.c.b16 %v494, %v492
        %v533 = vpack.c.b16 %v497, %v495
        %v534 = vpack.c.b16 %v498, %v496
        %v535 = vpack.c.b16 %v501, %v499
        %v536 = vpack.c.b16 %v502, %v500
        %v537 = vpack.c.b16 %v505, %v503
        %v538 = vpack.c.b16 %v506, %v504
        %571 = vmatprep.subr.bf16.mxu0 %v508
        %572 = vmatpush1.bf16.msra.mxu0 %v507
        %573 = vmatprep.subr.bf16.mxu0 %v510
        %574 = vmatpush1.bf16.msra.mxu0 %v509
        %575 = vmatprep.subr.bf16.mxu0 %v512
        %576 = vmatpush1.bf16.msra.mxu0 %v511
        %577 = vmatprep.subr.bf16.mxu0 %v514
        %578 = vmatpush1.bf16.msra.mxu0 %v513
        %579 = vmatprep.subr.bf16.mxu0 %v516
        %580 = vmatpush1.bf16.msra.mxu0 %v515
        %581 = vmatprep.subr.bf16.mxu0 %v518
        %582 = vmatpush1.bf16.msra.mxu0 %v517
        %583 = vmatprep.subr.bf16.mxu0 %v520
        %584 = vmatpush1.bf16.msra.mxu0 %v519
        %585 = vmatprep.subr.bf16.mxu0 %v522
        %586 = vmatpush1.bf16.msra.mxu0 %v521
        %587 = vmatprep.subr.bf16.mxu0 %v524
        %588 = vmatpush1.bf16.msra.mxu0 %v523
        %589 = vmatprep.subr.bf16.mxu0 %v526
        %590 = vmatpush1.bf16.msra.mxu0 %v525
        %591 = vmatprep.subr.bf16.mxu0 %v528
        %592 = vmatpush1.bf16.msra.mxu0 %v527
        %593 = vmatprep.subr.bf16.mxu0 %v530
        %594 = vmatpush1.bf16.msra.mxu0 %v529
        %595 = vmatprep.subr.bf16.mxu0 %v532
        %596 = vmatpush1.bf16.msra.mxu0 %v531
        %597 = vmatprep.subr.bf16.mxu0 %v534
        %598 = vmatpush1.bf16.msra.mxu0 %v533
        %599 = vmatprep.subr.bf16.mxu0 %v536
        %600 = vmatpush1.bf16.msra.mxu0 %v535
        %601 = vmatprep.subr.bf16.mxu0 %v538
        %602 = vmatpush1.bf16.msra.mxu0 %v537
        %603 = vmatprep.mubr.bf16.mxu0 %v348
        %604 = vmatmul.mubr.bf16.gmra.mrb[0].mxu0 %v347
        %v605 = vpop.f32.mrb[0].mxu0
        %v606 = vadd.f32 %v244, %v605
        %v607 = vpop.f32.mrb[0].mxu0
        %v608 = vadd.f32 %v248, %v607
        %v609 = vpop.f32.mrb[0].mxu0
        %v610 = vadd.f32 %v244, %v609
        %v611 = vpop.f32.mrb[0].mxu0
        %v612 = vadd.f32 %v248, %v611
        %613 = vmatprep.mubr.bf16.mxu0 %v350
        %614 = vmatmul.mubr.bf16.gmra.mrb[0].mxu0 %v349
        %v615 = vpop.f32.mrb[0].mxu0
        %v616 = vadd.f32 %v244, %v615
        %v617 = vpop.f32.mrb[0].mxu0
        %v618 = vadd.f32 %v248, %v617
        %v619 = vpop.f32.mrb[0].mxu0
        %v620 = vadd.f32 %v244, %v619
        %v621 = vpop.f32.mrb[0].mxu0
        %v622 = vadd.f32 %v248, %v621
        %623 = vmatprep.mubr.bf16.mxu0 %v352
        %624 = vmatmul.mubr.bf16.gmra.mrb[0].mxu0 %v351
        %v625 = vpop.f32.mrb[0].mxu0
        %v626 = vadd.f32 %v244, %v625
        %v627 = vpop.f32.mrb[0].mxu0
        %v628 = vadd.f32 %v248, %v627
        %v629 = vpop.f32.mrb[0].mxu0
        %v630 = vadd.f32 %v244, %v629
        %v631 = vpop.f32.mrb[0].mxu0
        %v632 = vadd.f32 %v248, %v631
        %633 = vmatprep.mubr.bf16.mxu0 %v354
        %634 = vmatmul.mubr.bf16.gmra.mrb[0].mxu0 %v353
        %v635 = vpop.f32.mrb[0].mxu0
        %v636 = vadd.f32 %v244, %v635
        %v637 = vpop.f32.mrb[0].mxu0
        %v638 = vadd.f32 %v248, %v637
        %v639 = vpop.f32.mrb[0].mxu0
        %v640 = vadd.f32 %v244, %v639
        %v641 = vpop.f32.mrb[0].mxu0
        %v642 = vadd.f32 %v248, %v641
        %643 = vmatprep.mubr.bf16.mxu0 %v356
        %644 = vmatmul.mubr.bf16.gmra.mrb[0].mxu0 %v355
        %v645 = vpop.f32.mrb[0].mxu0
        %v646 = vadd.f32 %v244, %v645
        %v647 = vpop.f32.mrb[0].mxu0
        %v648 = vadd.f32 %v248, %v647
        %v649 = vpop.f32.mrb[0].mxu0
        %v650 = vadd.f32 %v244, %v649
        %v651 = vpop.f32.mrb[0].mxu0
        %v652 = vadd.f32 %v248, %v651
        %653 = vmatprep.mubr.bf16.mxu0 %v358
        %654 = vmatmul.mubr.bf16.gmra.mrb[0].mxu0 %v357
        %v655 = vpop.f32.mrb[0].mxu0
        %v656 = vadd.f32 %v244, %v655
        %v657 = vpop.f32.mrb[0].mxu0
        %v658 = vadd.f32 %v248, %v657
        %v659 = vpop.f32.mrb[0].mxu0
        %v660 = vadd.f32 %v244, %v659
        %v661 = vpop.f32.mrb[0].mxu0
        %v662 = vadd.f32 %v248, %v661
        %663 = vmatprep.mubr.bf16.mxu0 %v360
        %664 = vmatmul.mubr.bf16.gmra.mrb[0].mxu0 %v359
        %v665 = vpop.f32.mrb[0].mxu0
        %v666 = vadd.f32 %v244, %v665
        %v667 = vpop.f32.mrb[0].mxu0
        %v668 = vadd.f32 %v248, %v667
        %v669 = vpop.f32.mrb[0].mxu0
        %v670 = vadd.f32 %v244, %v669
        %v671 = vpop.f32.mrb[0].mxu0
        %v672 = vadd.f32 %v248, %v671
        %673 = vmatprep.mubr.bf16.mxu0 %v362
        %674 = vmatmul.mubr.bf16.gmra.mrb[0].mxu0 %v361
        %v675 = vpop.f32.mrb[0].mxu0
        %v676 = vadd.f32 %v244, %v675
        %v677 = vpop.f32.mrb[0].mxu0
        %v678 = vadd.f32 %v248, %v677
        %v679 = vpop.f32.mrb[0].mxu0
        %v680 = vadd.f32 %v244, %v679
        %v681 = vpop.f32.mrb[0].mxu0
        %v682 = vadd.f32 %v248, %v681
        %683 = vmatprep.mubr.bf16.mxu0 %v364
        %684 = vmatmul.mubr.bf16.gmra.mrb[0].mxu0 %v363
        %v685 = vpop.f32.mrb[0].mxu0
        %v686 = vadd.f32 %v244, %v685
        %v687 = vpop.f32.mrb[0].mxu0
        %v688 = vadd.f32 %v248, %v687
        %v689 = vpop.f32.mrb[0].mxu0
        %v690 = vadd.f32 %v244, %v689
        %v691 = vpop.f32.mrb[0].mxu0
        %v692 = vadd.f32 %v248, %v691
        %693 = vmatprep.mubr.bf16.mxu0 %v366
        %694 = vmatmul.mubr.bf16.gmra.mrb[0].mxu0 %v365
        %v695 = vpop.f32.mrb[0].mxu0
        %v696 = vadd.f32 %v244, %v695
        %v697 = vpop.f32.mrb[0].mxu0
        %v698 = vadd.f32 %v248, %v697
        %v699 = vpop.f32.mrb[0].mxu0
        %v700 = vadd.f32 %v244, %v699
        %v701 = vpop.f32.mrb[0].mxu0
        %v702 = vadd.f32 %v248, %v701
        %703 = vmatprep.mubr.bf16.mxu0 %v368
        %704 = vmatmul.mubr.bf16.gmra.mrb[0].mxu0 %v367
        %v705 = vpop.f32.mrb[0].mxu0
        %v706 = vadd.f32 %v244, %v705
        %v707 = vpop.f32.mrb[0].mxu0
        %v708 = vadd.f32 %v248, %v707
        %v709 = vpop.f32.mrb[0].mxu0
        %v710 = vadd.f32 %v244, %v709
        %v711 = vpop.f32.mrb[0].mxu0
        %v712 = vadd.f32 %v248, %v711
        %713 = vmatprep.mubr.bf16.mxu0 %v370
        %714 = vmatmul.mubr.bf16.gmra.mrb[0].mxu0 %v369
        %v715 = vpop.f32.mrb[0].mxu0
        %v716 = vadd.f32 %v244, %v715
        %v717 = vpop.f32.mrb[0].mxu0
        %v718 = vadd.f32 %v248, %v717
        %v719 = vpop.f32.mrb[0].mxu0
        %v720 = vadd.f32 %v244, %v719
        %v721 = vpop.f32.mrb[0].mxu0
        %v722 = vadd.f32 %v248, %v721
        %723 = vmatprep.mubr.bf16.mxu0 %v372
        %724 = vmatmul.mubr.bf16.gmra.mrb[0].mxu0 %v371
        %v725 = vpop.f32.mrb[0].mxu0
        %v726 = vadd.f32 %v244, %v725
        %v727 = vpop.f32.mrb[0].mxu0
        %v728 = vadd.f32 %v248, %v727
        %v729 = vpop.f32.mrb[0].mxu0
        %v730 = vadd.f32 %v244, %v729
        %v731 = vpop.f32.mrb[0].mxu0
        %v732 = vadd.f32 %v248, %v731
        %733 = vmatprep.mubr.bf16.mxu0 %v374
        %734 = vmatmul.mubr.bf16.gmra.mrb[0].mxu0 %v373
        %v735 = vpop.f32.mrb[0].mxu0
        %v736 = vadd.f32 %v244, %v735
        %v737 = vpop.f32.mrb[0].mxu0
        %v738 = vadd.f32 %v248, %v737
        %v739 = vpop.f32.mrb[0].mxu0
        %v740 = vadd.f32 %v244, %v739
        %v741 = vpop.f32.mrb[0].mxu0
        %v742 = vadd.f32 %v248, %v741
        %743 = vmatprep.mubr.bf16.mxu0 %v376
        %744 = vmatmul.mubr.bf16.gmra.mrb[0].mxu0 %v375
        %v745 = vpop.f32.mrb[0].mxu0
        %v746 = vadd.f32 %v244, %v745
        %v747 = vpop.f32.mrb[0].mxu0
        %v748 = vadd.f32 %v248, %v747
        %v749 = vpop.f32.mrb[0].mxu0
        %v750 = vadd.f32 %v244, %v749
        %v751 = vpop.f32.mrb[0].mxu0
        %v752 = vadd.f32 %v248, %v751
        %753 = vmatprep.mubr.bf16.mxu0 %v378
        %754 = vmatmul.mubr.bf16.gmra.mrb[0].mxu0 %v377
        %v755 = vpop.f32.mrb[0].mxu0
        %v756 = vadd.f32 %v244, %v755
        %v757 = vpop.f32.mrb[0].mxu0
        %v758 = vadd.f32 %v248, %v757
        %v759 = vpop.f32.mrb[0].mxu0
        %v760 = vadd.f32 %v244, %v759
        %v761 = vpop.f32.mrb[0].mxu0
        %v762 = vadd.f32 %v248, %v761
        %763 = vdwg.mxu0
        %764 = vst [vmem:[%s166] sm:$0xff] %v606
        %765 = vst [vmem:[%s166 + $0x8] sm:$0xff] %v608
        %766 = vst [vmem:[%s166 + $0x10] sm:$0xff] %v610
        %767 = vst [vmem:[%s166 + $0x18] sm:$0xff] %v612
        %768 = vst [vmem:[%s166 + $0x20] sm:$0xff] %v616
        %769 = vst [vmem:[%s166 + $0x28] sm:$0xff] %v618
        %770 = vst [vmem:[%s166 + $0x30] sm:$0xff] %v620
        %771 = vst [vmem:[%s166 + $0x38] sm:$0xff] %v622
        %772 = vst [vmem:[%s166 + $0x40] sm:$0xff] %v626
        %773 = vst [vmem:[%s166 + $0x48] sm:$0xff] %v628
        %774 = vst [vmem:[%s166 + $0x50] sm:$0xff] %v630
        %775 = vst [vmem:[%s166 + $0x58] sm:$0xff] %v632
        %776 = vst [vmem:[%s166 + $0x60] sm:$0xff] %v636
        %777 = vst [vmem:[%s166 + $0x68] sm:$0xff] %v638
        %778 = vst [vmem:[%s166 + $0x70] sm:$0xff] %v640
        %779 = vst [vmem:[%s166 + $0x78] sm:$0xff] %v642
        %780 = vst [vmem:[%s166 + $0x80] sm:$0xff] %v646
        %781 = vst [vmem:[%s166 + $0x88] sm:$0xff] %v648
        %782 = vst [vmem:[%s166 + $0x90] sm:$0xff] %v650
        %783 = vst [vmem:[%s166 + $0x98] sm:$0xff] %v652
        %784 = vst [vmem:[%s166 + $0xa0] sm:$0xff] %v656
        %785 = vst [vmem:[%s166 + $0xa8] sm:$0xff] %v658
        %786 = vst [vmem:[%s166 + $0xb0] sm:$0xff] %v660
        %787 = vst [vmem:[%s166 + $0xb8] sm:$0xff] %v662
        %788 = vst [vmem:[%s166 + $0xc0] sm:$0xff] %v666
        %789 = vst [vmem:[%s166 + $0xc8] sm:$0xff] %v668
        %790 = vst [vmem:[%s166 + $0xd0] sm:$0xff] %v670
        %791 = vst [vmem:[%s166 + $0xd8] sm:$0xff] %v672
        %792 = vst [vmem:[%s166 + $0xe0] sm:$0xff] %v676
        %793 = vst [vmem:[%s166 + $0xe8] sm:$0xff] %v678
        %794 = vst [vmem:[%s166 + $0xf0] sm:$0xff] %v680
        %795 = vst [vmem:[%s166 + $0xf8] sm:$0xff] %v682
        %796 = vst [vmem:[%s166 + $0x100] sm:$0xff] %v686
        %797 = vst [vmem:[%s166 + $0x108] sm:$0xff] %v688
        %798 = vst [vmem:[%s166 + $0x110] sm:$0xff] %v690
        %799 = vst [vmem:[%s166 + $0x118] sm:$0xff] %v692
        %800 = vst [vmem:[%s166 + $0x120] sm:$0xff] %v696
        %801 = vst [vmem:[%s166 + $0x128] sm:$0xff] %v698
        %802 = vst [vmem:[%s166 + $0x130] sm:$0xff] %v700
        %803 = vst [vmem:[%s166 + $0x138] sm:$0xff] %v702
        %804 = vst [vmem:[%s166 + $0x140] sm:$0xff] %v706
        %805 = vst [vmem:[%s166 + $0x148] sm:$0xff] %v708
        %806 = vst [vmem:[%s166 + $0x150] sm:$0xff] %v710
        %807 = vst [vmem:[%s166 + $0x158] sm:$0xff] %v712
        %808 = vst [vmem:[%s166 + $0x160] sm:$0xff] %v716
        %809 = vst [vmem:[%s166 + $0x168] sm:$0xff] %v718
        %810 = vst [vmem:[%s166 + $0x170] sm:$0xff] %v720
        %811 = vst [vmem:[%s166 + $0x178] sm:$0xff] %v722
        %812 = vst [vmem:[%s166 + $0x180] sm:$0xff] %v726
        %813 = vst [vmem:[%s166 + $0x188] sm:$0xff] %v728
        %814 = vst [vmem:[%s166 + $0x190] sm:$0xff] %v730
        %815 = vst [vmem:[%s166 + $0x198] sm:$0xff] %v732
        %816 = vst [vmem:[%s166 + $0x1a0] sm:$0xff] %v736
        %817 = vst [vmem:[%s166 + $0x1a8] sm:$0xff] %v738
        %818 = vst [vmem:[%s166 + $0x1b0] sm:$0xff] %v740
        %819 = vst [vmem:[%s166 + $0x1b8] sm:$0xff] %v742
        %820 = vst [vmem:[%s166 + $0x1c0] sm:$0xff] %v746
        %821 = vst [vmem:[%s166 + $0x1c8] sm:$0xff] %v748
        %822 = vst [vmem:[%s166 + $0x1d0] sm:$0xff] %v750
        %823 = vst [vmem:[%s166 + $0x1d8] sm:$0xff] %v752
        %824 = vst [vmem:[%s166 + $0x1e0] sm:$0xff] %v756
        %825 = vst [vmem:[%s166 + $0x1e8] sm:$0xff] %v758
        %826 = vst [vmem:[%s166 + $0x1f0] sm:$0xff] %v760
        %827 = vst [vmem:[%s166 + $0x1f8] sm:$0xff] %v762
        %s828 = sand.u32 %s93, 1
        %s829 = scalar_lea.sflag [#allocation3], %s828
        %s830 = sand.u32 %s93, 1
        %s831 = smul.addr %s830, 512
        %s832 = scalar_lea.vmem [#allocation2], %s831
        // Predicated region
        $region33: #{attention_forward.7} parent=31 // pred_check
          %p833 = pneg %p103
        $region34: #{attention_forward.7} parent=31 // pred_check_branch
          %835 = sbr.rel (%p833) target = $region36
        $region35: #{attention_forward.7} parent=31 // pred_region
          %s836 = smul.u32 32, %s17
          %s838 = ssub.s32 8192, 8192
          %839 = vsyncadd %s829, %s838
          %s840 = smul.addr %s836, 2
          %s841 = smul.addr %s840, 128
          %s842 = scalar_lea.hbm %s3, %s841
          %s843 = sshll.u32 %s832, 4
          %s844 = int_to_ptr.vmem [resolvable:$true] %s843
          %849 = dma.vmem_to_hbm [thread:$0]  %s844, 8192, %s842, %s829, 256, 256, 16
        $region36: #{attention_forward.7} parent=31 // pred_fallthru
          _
      $region32: #{attention_forward.7} parent=5 // pred_fallthru
        _
      %p850 = scmp.le.s32.totalorder 2, %s12
      // Predicated region
      $region37: #{attention_forward.7} parent=5 // pred_check
        %p851 = pneg %p850
      $region38: #{attention_forward.7} parent=5 // pred_check_branch
        %853 = sbr.rel (%p851) target = $region40
      $region39: #{attention_forward.7} parent=5 // pred_region
        %s854 = ssub.s32 %s12, 2
        // Predicated region
        $region41: #{attention_forward.7} parent=39 // pred_check
          %p855 = pneg %p109
        $region42: #{attention_forward.7} parent=39 // pred_check_branch
          %857 = sbr.rel (%p855) target = $region44
        $region43: #{attention_forward.7} parent=39 // pred_region
          %s858 = sand.u32 %s94, 1
          %s859 = scalar_lea.sflag [#allocation3], %s858
          %s860 = sand.u32 %s94, 1
          %s861 = smul.addr %s860, 512
          %s862 = scalar_lea.vmem [#allocation2], %s861
          %863 = dma.done %s859, 8192
        $region44: #{attention_forward.7} parent=39 // pred_fallthru
          _
      $region40: #{attention_forward.7} parent=5 // pred_fallthru
        _
    $region6: #{attention_forward.7} parent=1 // loop_footer
      %s16 = sadd.s32 1, %s12
    $region7: #{attention_forward.7} parent=1 // loop_footer_branch
      %11 = sbr.rel target = $region3
    $region8: #{attention_forward.7} parent=1 // loop_exit
      _
    %864 = vsyncpa [#allocation3], 1
    %s865 = scalar_lea.sflag [#allocation3], 1
    %866 = vsyncpa %s865, 1

</llo_original>
